<compile_context>
chip_gen: v7x
topology: tpu7x:2x2x1
jax: 0.10.0
libtpu: 0.0.40
codegen_flags: <defaults>
</compile_context>

<pallas_src>
import jax
import jax.numpy as jnp
from jax.experimental import pallas as pl
from jax.experimental.pallas import tpu as pltpu

# Model hyper-parameters (matching the PyTorch module defaults, small input/output).
INPUT_DIM = 32
OUTPUT_DIM = 1
D_MODEL = 64
NHEAD = 4            # only affects the head split; with seq_len==1 heads are inert
NUM_LAYERS = 4
DIM_FF = 128
EPS = 1e-5

BATCH = 16
TILE_M_MAX = 128     # batch-tile cap (fills an MXU pass on v5e; fine on v6e/v7x)

# ---- fp32 parameter slab layout: one (N_ROWS, 128) array, one row per vector ----
SLAB_W = 128
ROW_BEMB = 0
ROWS_PER_LAYER = 7
_OFF_BATTN, _OFF_LN1G, _OFF_LN1B, _OFF_B1, _OFF_B2, _OFF_LN2G, _OFF_LN2B = range(7)
ROW_WOUT = 1 + ROWS_PER_LAYER * NUM_LAYERS          # wout in cols 0:64, bout at col 64
N_ROWS = 32                                         # padded to a sublane multiple


def _layer_base(l):
    return 1 + ROWS_PER_LAYER * l


def _layernorm(z, g, b):
    # independent reductions (fp32): sum and sum-of-squares, then var = E[z^2] - mu^2
    inv_n = 1.0 / z.shape[-1]
    mu = jnp.sum(z, axis=-1, keepdims=True) * inv_n
    ms = jnp.sum(z * z, axis=-1, keepdims=True) * inv_n
    var = ms - mu * mu
    return (z - mu) * jax.lax.rsqrt(var + EPS) * g + b


def transformer_kernel(x_ref, wemb_ref, wattn_ref, w1_ref, w2_ref, slab_ref, o_ref):
    bf16 = jnp.bfloat16

    def row(r, width=D_MODEL):
        # static (1, width) fp32 view of the parameter slab
        return slab_ref[r:r + 1, :width]

    # feature embedding (bf16 operands, fp32 MXU accumulation); cast x inside kernel.
    h = jnp.dot(x_ref[...].astype(bf16), wemb_ref[...],
                preferred_element_type=jnp.float32) + row(ROW_BEMB)

    # num_layers post-norm encoder layers, statically unrolled (static leading-axis
    # slices of the stacked (L, ...) weights are free views).
    for l in range(NUM_LAYERS):
        base = _layer_base(l)

        # fused attention + residual: z = h @ (I + Wv@Wo) + (bv@Wo + bo)
        z = jnp.dot(h.astype(bf16), wattn_ref[l],
                    preferred_element_type=jnp.float32) + row(base + _OFF_BATTN)
        h = _layernorm(z, row(base + _OFF_LN1G), row(base + _OFF_LN1B))

        # feed-forward block (relu)
        f = jnp.maximum(
            jnp.dot(h.astype(bf16), w1_ref[l],
                    preferred_element_type=jnp.float32) + row(base + _OFF_B1, DIM_FF),
            0.0)
        f = jnp.dot(f.astype(bf16), w2_ref[l],
                    preferred_element_type=jnp.float32) + row(base + _OFF_B2)
        h = _layernorm(h + f, row(base + _OFF_LN2G), row(base + _OFF_LN2B))

    # output head: D_MODEL -> 1 as a lane reduction (no N=1 MXU pass), fp32.
    wout = slab_ref[ROW_WOUT:ROW_WOUT + 1, :D_MODEL]                       # (1, 64)
    bout = slab_ref[ROW_WOUT:ROW_WOUT + 1, D_MODEL:D_MODEL + OUTPUT_DIM]   # (1, 1)
    logits = jnp.sum(h * wout, axis=-1, keepdims=True) + bout
    o_ref[...] = jax.nn.sigmoid(logits)


def _resident(shape):
    # weight block DMA'd once and kept resident across all batch-tile grid steps
    zeros = (0,) * len(shape)
    return pl.BlockSpec(shape, lambda i, _z=zeros: _z)


@jax.jit
def transformer_forward(x, packed):
    wemb, wattn, w1, w2, slab = packed
    B = x.shape[0]

    # Batch tiling: one tile if B <= TILE_M_MAX, otherwise 128-row tiles over a
    # "parallel" grid axis (weights stay resident; shards across TCs on v7x).
    tm = B if B <= TILE_M_MAX else TILE_M_MAX
    Bp = ((B + tm - 1) // tm) * tm
    x_in = x if Bp == B else jnp.pad(x, ((0, Bp - B), (0, 0)))
    grid = (Bp // tm,)

    in_specs = [
        pl.BlockSpec((tm, INPUT_DIM), lambda i: (i, 0)),   # x (batch tile, fp32)
        _resident(wemb.shape),
        _resident(wattn.shape),
        _resident(w1.shape),
        _resident(w2.shape),
        _resident(slab.shape),
    ]

    flops = 2 * Bp * (INPUT_DIM * D_MODEL
                      + NUM_LAYERS * (D_MODEL * D_MODEL
                                      + D_MODEL * DIM_FF
                                      + DIM_FF * D_MODEL)
                      + D_MODEL)
    transcendentals = Bp * (2 * NUM_LAYERS + 1)            # rsqrt per LN + sigmoid
    bytes_accessed = (x_in.size * x_in.dtype.itemsize
                      + sum(p.size * p.dtype.itemsize for p in packed)
                      + Bp * OUTPUT_DIM * 4)

    out = pl.pallas_call(
        transformer_kernel,
        out_shape=jax.ShapeDtypeStruct((Bp, OUTPUT_DIM), jnp.float32),
        grid=grid,
        in_specs=in_specs,
        out_specs=pl.BlockSpec((tm, OUTPUT_DIM), lambda i: (i, 0)),
        compiler_params=pltpu.CompilerParams(
            dimension_semantics=("parallel",)),
        cost_estimate=pl.CostEstimate(flops=flops,
                                      transcendentals=transcendentals,
                                      bytes_accessed=bytes_accessed),
    )(x_in, wemb, wattn, w1, w2, slab)

    out = out[:B]
    # torch .squeeze(): drop all size-1 dims (output_dim == 1 -> (B,))
    return jnp.squeeze(out)


def init_params(key):
    """Raw (unfused, fp32) parameters, PyTorch-equivalent layout."""
    ks = jax.random.split(key, 12)
    s = 0.05
    wemb = jax.random.normal(ks[0], (INPUT_DIM, D_MODEL), jnp.float32) * s
    bemb = jax.random.normal(ks[1], (1, D_MODEL), jnp.float32) * s
    wv = jax.random.normal(ks[2], (NUM_LAYERS, D_MODEL, D_MODEL), jnp.float32) * s
    bv = jax.random.normal(ks[3], (NUM_LAYERS, 1, D_MODEL), jnp.float32) * s
    wo = jax.random.normal(ks[4], (NUM_LAYERS, D_MODEL, D_MODEL), jnp.float32) * s
    bo = jax.random.normal(ks[5], (NUM_LAYERS, 1, D_MODEL), jnp.float32) * s
    ln1g = jnp.ones((NUM_LAYERS, 1, D_MODEL), jnp.float32)
    ln1b = jnp.zeros((NUM_LAYERS, 1, D_MODEL), jnp.float32)
    w1 = jax.random.normal(ks[6], (NUM_LAYERS, D_MODEL, DIM_FF), jnp.float32) * s
    b1 = jax.random.normal(ks[7], (NUM_LAYERS, 1, DIM_FF), jnp.float32) * s
    w2 = jax.random.normal(ks[8], (NUM_LAYERS, DIM_FF, D_MODEL), jnp.float32) * s
    b2 = jax.random.normal(ks[9], (NUM_LAYERS, 1, D_MODEL), jnp.float32) * s
    ln2g = jnp.ones((NUM_LAYERS, 1, D_MODEL), jnp.float32)
    ln2b = jnp.zeros((NUM_LAYERS, 1, D_MODEL), jnp.float32)
    wout = jax.random.normal(ks[10], (D_MODEL, OUTPUT_DIM), jnp.float32) * s
    bout = jax.random.normal(ks[11], (1, OUTPUT_DIM), jnp.float32) * s
    return (wemb, bemb, wv, bv, wo, bo, ln1g, ln1b,
            w1, b1, w2, b2, ln2g, ln2b, wout, bout)


def pack_params(raw):
    """Fold (I + Wv@Wo) in fp32, cast weight matrices to bf16, and pack every small
    fp32 vector (biases / LN affine / output head) into one (N_ROWS, 128) slab."""
    (wemb, bemb, wv, bv, wo, bo, ln1g, ln1b,
     w1, b1, w2, b2, ln2g, ln2b, wout, bout) = raw

    eye = jnp.eye(D_MODEL, dtype=jnp.float32)
    wattn = eye[None, :, :] + jnp.einsum('lij,ljk->lik', wv, wo)     # residual folded
    battn = jnp.einsum('lij,ljk->lik', bv, wo) + bo

    def pad_row(v):
        v = v.reshape(-1).astype(jnp.float32)
        return jnp.pad(v, (0, SLAB_W - v.shape[0]))

    rows = [pad_row(bemb)]
    for l in range(NUM_LAYERS):
        rows += [pad_row(battn[l]), pad_row(ln1g[l]), pad_row(ln1b[l]),
                 pad_row(b1[l]), pad_row(b2[l]), pad_row(ln2g[l]), pad_row(ln2b[l])]
    wout_row = jnp.concatenate(
        [wout.reshape(-1), bout.reshape(-1),
         jnp.zeros((SLAB_W - D_MODEL - OUTPUT_DIM,), jnp.float32)])
    rows.append(wout_row)
    slab = jnp.stack(rows)                                           # (30, 128)
    slab = jnp.pad(slab, ((0, N_ROWS - slab.shape[0]), (0, 0)))      # (32, 128)

    bf16 = jnp.bfloat16
    return (wemb.astype(bf16), wattn.astype(bf16),
            w1.astype(bf16), w2.astype(bf16), slab)


def _slab_row(slab, r, width=D_MODEL):
    return slab[r:r + 1, :width]


def reference_forward_f32(x, raw):
    """Pure-JAX fp32 reference of the original (unfused, PyTorch-faithful) math."""
    (wemb, bemb, wv, bv, wo, bo, ln1g, ln1b,
     w1, b1, w2, b2, ln2g, ln2b, wout, bout) = raw

    def ln(z, g, b):
        mu = jnp.mean(z, axis=-1, keepdims=True)
        var = jnp.mean((z - mu) ** 2, axis=-1, keepdims=True)
        return (z - mu) * jax.lax.rsqrt(var + EPS) * g + b

    h = x @ wemb + bemb
    for l in range(NUM_LAYERS):
        a = (h @ wv[l] + bv[l]) @ wo[l] + bo[l]
        h = ln(h + a, ln1g[l], ln1b[l])
        f = jnp.maximum(h @ w1[l] + b1[l], 0.0) @ w2[l] + b2[l]
        h = ln(h + f, ln2g[l], ln2b[l])
    return jnp.squeeze(jax.nn.sigmoid(h @ wout + bout))


def reference_forward_matched(x, packed):
    """Pure-JAX reference with the SAME precision path / fold as the kernel."""
    wemb, wattn, w1, w2, slab = packed
    bf16 = jnp.bfloat16
    h = jnp.dot(x.astype(bf16), wemb,
                preferred_element_type=jnp.float32) + _slab_row(slab, ROW_BEMB)
    for l in range(NUM_LAYERS):
        base = _layer_base(l)
        z = jnp.dot(h.astype(bf16), wattn[l],
                    preferred_element_type=jnp.float32) + _slab_row(slab, base + _OFF_BATTN)
        h = _layernorm(z, _slab_row(slab, base + _OFF_LN1G),
                       _slab_row(slab, base + _OFF_LN1B))
        f = jnp.maximum(
            jnp.dot(h.astype(bf16), w1[l],
                    preferred_element_type=jnp.float32) + _slab_row(slab, base + _OFF_B1, DIM_FF),
            0.0)
        f = jnp.dot(f.astype(bf16), w2[l],
                    preferred_element_type=jnp.float32) + _slab_row(slab, base + _OFF_B2)
        h = _layernorm(h + f, _slab_row(slab, base + _OFF_LN2G),
                       _slab_row(slab, base + _OFF_LN2B))
    wout = _slab_row(slab, ROW_WOUT, D_MODEL)
    bout = slab[ROW_WOUT:ROW_WOUT + 1, D_MODEL:D_MODEL + OUTPUT_DIM]
    logits = jnp.sum(h * wout, axis=-1, keepdims=True) + bout
    return jnp.squeeze(jax.nn.sigmoid(logits))


if __name__ == "__main__":
    key = jax.random.PRNGKey(0)
    k_x, k_p = jax.random.split(key)
    x = jax.random.normal(k_x, (BATCH, INPUT_DIM), jnp.float32)
    raw = init_params(k_p)
    packed = pack_params(raw)

    out = jax.block_until_ready(transformer_forward(x, packed))
    assert out.shape == (BATCH,), out.shape

    # Tight check against a precision-matched (bf16-operand, folded-weight) reference.
    ref_m = reference_forward_matched(x, packed)
    assert jnp.allclose(out, ref_m, atol=1e-3, rtol=1e-3), (out, ref_m)

    # Semantics check against the fp32, unfused (PyTorch-faithful) reference.
    # TODO(synk): bf16 weight cast + residual fold => ~1e-2-level deviation from fp32.
    ref_f32 = reference_forward_f32(x, raw)
    assert jnp.allclose(out, ref_f32, atol=2e-2, rtol=2e-2), (out, ref_f32)

    print("KERNEL_OK")
</pallas_src>

<mosaic_0001>
module attributes {stable_mosaic.version = 11 : i64} {
  func.func @transformer_kernel(%arg0: i32, %arg1: memref<16x32xf32, #tpu.memory_space<vmem>>, %arg2: memref<32x64xbf16, #tpu.memory_space<vmem>>, %arg3: memref<4x64x64xbf16, #tpu.memory_space<vmem>>, %arg4: memref<4x64x128xbf16, #tpu.memory_space<vmem>>, %arg5: memref<4x128x64xbf16, #tpu.memory_space<vmem>>, %arg6: memref<32x128xf32, #tpu.memory_space<vmem>>, %arg7: memref<16x1xf32, #tpu.memory_space<vmem>>) attributes {dimension_semantics = [#tpu.dimension_semantics<parallel>], iteration_bounds = array<i64: 1>, scalar_prefetch = 0 : i64, scratch_operands = 0 : i64, tpu.core_type = #tpu.core_type<tc>, window_params = [{transform_indices = @transform_0, window_bounds = array<i64: 16, 32>}, {pipeline_mode = #tpu.pipeline_mode<synchronous>, transform_indices = @transform_1, window_bounds = array<i64: 32, 64>}, {pipeline_mode = #tpu.pipeline_mode<synchronous>, transform_indices = @transform_2, window_bounds = array<i64: 4, 64, 64>}, {pipeline_mode = #tpu.pipeline_mode<synchronous>, transform_indices = @transform_3, window_bounds = array<i64: 4, 64, 128>}, {pipeline_mode = #tpu.pipeline_mode<synchronous>, transform_indices = @transform_4, window_bounds = array<i64: 4, 128, 64>}, {pipeline_mode = #tpu.pipeline_mode<synchronous>, transform_indices = @transform_5, window_bounds = array<i64: 32, 128>}, {transform_indices = @transform_6, window_bounds = array<i64: 16, 1>}]} {
    %c0 = arith.constant 0 : index
    %c0_0 = arith.constant 0 : index
    %0 = vector.load %arg1[%c0, %c0_0] : memref<16x32xf32, #tpu.memory_space<vmem>>, vector<16x32xf32>
    %1 = arith.truncf %0 : vector<16x32xf32> to vector<16x32xbf16>
    %c0_1 = arith.constant 0 : index
    %c0_2 = arith.constant 0 : index
    %2 = vector.load %arg2[%c0_1, %c0_2] : memref<32x64xbf16, #tpu.memory_space<vmem>>, vector<32x64xbf16>
    %cst = arith.constant dense<0.000000e+00> : vector<16x64xf32>
    %3 = tpu.matmul %1, %2, %cst {dimension_numbers = #tpu.dot_dimension_numbers<[1], [0], [0], [1], [0, 0, 1, 1], [], []>} : vector<16x32xbf16>, vector<32x64xbf16>, vector<16x64xf32> -> vector<16x64xf32>
    %c0_3 = arith.constant 0 : index
    %c0_4 = arith.constant 0 : index
    %4 = vector.load %arg6[%c0_3, %c0_4] : memref<32x128xf32, #tpu.memory_space<vmem>>, vector<1x64xf32>
    %5 = vector.broadcast %4 : vector<1x64xf32> to vector<16x64xf32>
    %6 = arith.addf %3, %5 : vector<16x64xf32>
    %7 = arith.truncf %6 : vector<16x64xf32> to vector<16x64xbf16>
    %c0_5 = arith.constant 0 : index
    %c0_6 = arith.constant 0 : index
    %c0_7 = arith.constant 0 : index
    %8 = vector.load %arg3[%c0_5, %c0_6, %c0_7] : memref<4x64x64xbf16, #tpu.memory_space<vmem>>, vector<1x64x64xbf16>
    %9 = vector.shape_cast %8 : vector<1x64x64xbf16> to vector<64x64xbf16>
    %cst_8 = arith.constant dense<0.000000e+00> : vector<16x64xf32>
    %10 = tpu.matmul %7, %9, %cst_8 {dimension_numbers = #tpu.dot_dimension_numbers<[1], [0], [0], [1], [0, 0, 1, 1], [], []>} : vector<16x64xbf16>, vector<64x64xbf16>, vector<16x64xf32> -> vector<16x64xf32>
    %c1 = arith.constant 1 : index
    %c0_9 = arith.constant 0 : index
    %11 = vector.load %arg6[%c1, %c0_9] : memref<32x128xf32, #tpu.memory_space<vmem>>, vector<1x64xf32>
    %12 = vector.broadcast %11 : vector<1x64xf32> to vector<16x64xf32>
    %13 = arith.addf %10, %12 : vector<16x64xf32>
    %c2 = arith.constant 2 : index
    %c0_10 = arith.constant 0 : index
    %14 = vector.load %arg6[%c2, %c0_10] : memref<32x128xf32, #tpu.memory_space<vmem>>, vector<1x64xf32>
    %c3 = arith.constant 3 : index
    %c0_11 = arith.constant 0 : index
    %15 = vector.load %arg6[%c3, %c0_11] : memref<32x128xf32, #tpu.memory_space<vmem>>, vector<1x64xf32>
    %cst_12 = arith.constant dense<0.000000e+00> : vector<16xf32>
    %16 = vector.multi_reduction <add>, %13, %cst_12 [1] : vector<16x64xf32> to vector<16xf32>
    %17 = vector.shape_cast %16 : vector<16xf32> to vector<16x1xf32>
    %cst_13 = arith.constant 1.562500e-02 : f32
    %18 = vector.broadcast %cst_13 : f32 to vector<16x1xf32>
    %19 = arith.mulf %17, %18 : vector<16x1xf32>
    %20 = arith.mulf %13, %13 : vector<16x64xf32>
    %cst_14 = arith.constant dense<0.000000e+00> : vector<16xf32>
    %21 = vector.multi_reduction <add>, %20, %cst_14 [1] : vector<16x64xf32> to vector<16xf32>
    %22 = vector.shape_cast %21 : vector<16xf32> to vector<16x1xf32>
    %cst_15 = arith.constant 1.562500e-02 : f32
    %23 = vector.broadcast %cst_15 : f32 to vector<16x1xf32>
    %24 = arith.mulf %22, %23 : vector<16x1xf32>
    %25 = arith.mulf %19, %19 : vector<16x1xf32>
    %26 = arith.subf %24, %25 : vector<16x1xf32>
    %27 = vector.broadcast %19 : vector<16x1xf32> to vector<16x64xf32>
    %28 = arith.subf %13, %27 : vector<16x64xf32>
    %cst_16 = arith.constant 9.99999974E-6 : f32
    %29 = vector.broadcast %cst_16 : f32 to vector<16x1xf32>
    %30 = arith.addf %26, %29 : vector<16x1xf32>
    %31 = math.rsqrt %30 : vector<16x1xf32>
    %32 = vector.broadcast %31 : vector<16x1xf32> to vector<16x64xf32>
    %33 = arith.mulf %28, %32 : vector<16x64xf32>
    %34 = vector.broadcast %14 : vector<1x64xf32> to vector<16x64xf32>
    %35 = arith.mulf %33, %34 : vector<16x64xf32>
    %36 = vector.broadcast %15 : vector<1x64xf32> to vector<16x64xf32>
    %37 = arith.addf %35, %36 : vector<16x64xf32>
    %38 = arith.truncf %37 : vector<16x64xf32> to vector<16x64xbf16>
    %c0_17 = arith.constant 0 : index
    %c0_18 = arith.constant 0 : index
    %c0_19 = arith.constant 0 : index
    %39 = vector.load %arg4[%c0_17, %c0_18, %c0_19] : memref<4x64x128xbf16, #tpu.memory_space<vmem>>, vector<1x64x128xbf16>
    %40 = vector.shape_cast %39 : vector<1x64x128xbf16> to vector<64x128xbf16>
    %cst_20 = arith.constant dense<0.000000e+00> : vector<16x128xf32>
    %41 = tpu.matmul %38, %40, %cst_20 {dimension_numbers = #tpu.dot_dimension_numbers<[1], [0], [0], [1], [0, 0, 1, 1], [], []>} : vector<16x64xbf16>, vector<64x128xbf16>, vector<16x128xf32> -> vector<16x128xf32>
    %c4 = arith.constant 4 : index
    %c0_21 = arith.constant 0 : index
    %42 = vector.load %arg6[%c4, %c0_21] : memref<32x128xf32, #tpu.memory_space<vmem>>, vector<1x128xf32>
    %43 = vector.broadcast %42 : vector<1x128xf32> to vector<16x128xf32>
    %44 = arith.addf %41, %43 : vector<16x128xf32>
    %cst_22 = arith.constant 0.000000e+00 : f32
    %45 = vector.broadcast %cst_22 : f32 to vector<16x128xf32>
    %46 = arith.maximumf %44, %45 : vector<16x128xf32>
    %47 = arith.truncf %46 : vector<16x128xf32> to vector<16x128xbf16>
    %c0_23 = arith.constant 0 : index
    %c0_24 = arith.constant 0 : index
    %c0_25 = arith.constant 0 : index
    %48 = vector.load %arg5[%c0_23, %c0_24, %c0_25] : memref<4x128x64xbf16, #tpu.memory_space<vmem>>, vector<1x128x64xbf16>
    %49 = vector.shape_cast %48 : vector<1x128x64xbf16> to vector<128x64xbf16>
    %cst_26 = arith.constant dense<0.000000e+00> : vector<16x64xf32>
    %50 = tpu.matmul %47, %49, %cst_26 {dimension_numbers = #tpu.dot_dimension_numbers<[1], [0], [0], [1], [0, 0, 1, 1], [], []>} : vector<16x128xbf16>, vector<128x64xbf16>, vector<16x64xf32> -> vector<16x64xf32>
    %c5 = arith.constant 5 : index
    %c0_27 = arith.constant 0 : index
    %51 = vector.load %arg6[%c5, %c0_27] : memref<32x128xf32, #tpu.memory_space<vmem>>, vector<1x64xf32>
    %52 = vector.broadcast %51 : vector<1x64xf32> to vector<16x64xf32>
    %53 = arith.addf %50, %52 : vector<16x64xf32>
    %54 = arith.addf %37, %53 : vector<16x64xf32>
    %c6 = arith.constant 6 : index
    %c0_28 = arith.constant 0 : index
    %55 = vector.load %arg6[%c6, %c0_28] : memref<32x128xf32, #tpu.memory_space<vmem>>, vector<1x64xf32>
    %c7 = arith.constant 7 : index
    %c0_29 = arith.constant 0 : index
    %56 = vector.load %arg6[%c7, %c0_29] : memref<32x128xf32, #tpu.memory_space<vmem>>, vector<1x64xf32>
    %cst_30 = arith.constant dense<0.000000e+00> : vector<16xf32>
    %57 = vector.multi_reduction <add>, %54, %cst_30 [1] : vector<16x64xf32> to vector<16xf32>
    %58 = vector.shape_cast %57 : vector<16xf32> to vector<16x1xf32>
    %cst_31 = arith.constant 1.562500e-02 : f32
    %59 = vector.broadcast %cst_31 : f32 to vector<16x1xf32>
    %60 = arith.mulf %58, %59 : vector<16x1xf32>
    %61 = arith.mulf %54, %54 : vector<16x64xf32>
    %cst_32 = arith.constant dense<0.000000e+00> : vector<16xf32>
    %62 = vector.multi_reduction <add>, %61, %cst_32 [1] : vector<16x64xf32> to vector<16xf32>
    %63 = vector.shape_cast %62 : vector<16xf32> to vector<16x1xf32>
    %cst_33 = arith.constant 1.562500e-02 : f32
    %64 = vector.broadcast %cst_33 : f32 to vector<16x1xf32>
    %65 = arith.mulf %63, %64 : vector<16x1xf32>
    %66 = arith.mulf %60, %60 : vector<16x1xf32>
    %67 = arith.subf %65, %66 : vector<16x1xf32>
    %68 = vector.broadcast %60 : vector<16x1xf32> to vector<16x64xf32>
    %69 = arith.subf %54, %68 : vector<16x64xf32>
    %cst_34 = arith.constant 9.99999974E-6 : f32
    %70 = vector.broadcast %cst_34 : f32 to vector<16x1xf32>
    %71 = arith.addf %67, %70 : vector<16x1xf32>
    %72 = math.rsqrt %71 : vector<16x1xf32>
    %73 = vector.broadcast %72 : vector<16x1xf32> to vector<16x64xf32>
    %74 = arith.mulf %69, %73 : vector<16x64xf32>
    %75 = vector.broadcast %55 : vector<1x64xf32> to vector<16x64xf32>
    %76 = arith.mulf %74, %75 : vector<16x64xf32>
    %77 = vector.broadcast %56 : vector<1x64xf32> to vector<16x64xf32>
    %78 = arith.addf %76, %77 : vector<16x64xf32>
    %79 = arith.truncf %78 : vector<16x64xf32> to vector<16x64xbf16>
    %c1_35 = arith.constant 1 : index
    %c0_36 = arith.constant 0 : index
    %c0_37 = arith.constant 0 : index
    %80 = vector.load %arg3[%c1_35, %c0_36, %c0_37] : memref<4x64x64xbf16, #tpu.memory_space<vmem>>, vector<1x64x64xbf16>
    %81 = vector.shape_cast %80 : vector<1x64x64xbf16> to vector<64x64xbf16>
    %cst_38 = arith.constant dense<0.000000e+00> : vector<16x64xf32>
    %82 = tpu.matmul %79, %81, %cst_38 {dimension_numbers = #tpu.dot_dimension_numbers<[1], [0], [0], [1], [0, 0, 1, 1], [], []>} : vector<16x64xbf16>, vector<64x64xbf16>, vector<16x64xf32> -> vector<16x64xf32>
    %c8 = arith.constant 8 : index
    %c0_39 = arith.constant 0 : index
    %83 = vector.load %arg6[%c8, %c0_39] : memref<32x128xf32, #tpu.memory_space<vmem>>, vector<1x64xf32>
    %84 = vector.broadcast %83 : vector<1x64xf32> to vector<16x64xf32>
    %85 = arith.addf %82, %84 : vector<16x64xf32>
    %c9 = arith.constant 9 : index
    %c0_40 = arith.constant 0 : index
    %86 = vector.load %arg6[%c9, %c0_40] : memref<32x128xf32, #tpu.memory_space<vmem>>, vector<1x64xf32>
    %c10 = arith.constant 10 : index
    %c0_41 = arith.constant 0 : index
    %87 = vector.load %arg6[%c10, %c0_41] : memref<32x128xf32, #tpu.memory_space<vmem>>, vector<1x64xf32>
    %cst_42 = arith.constant dense<0.000000e+00> : vector<16xf32>
    %88 = vector.multi_reduction <add>, %85, %cst_42 [1] : vector<16x64xf32> to vector<16xf32>
    %89 = vector.shape_cast %88 : vector<16xf32> to vector<16x1xf32>
    %cst_43 = arith.constant 1.562500e-02 : f32
    %90 = vector.broadcast %cst_43 : f32 to vector<16x1xf32>
    %91 = arith.mulf %89, %90 : vector<16x1xf32>
    %92 = arith.mulf %85, %85 : vector<16x64xf32>
    %cst_44 = arith.constant dense<0.000000e+00> : vector<16xf32>
    %93 = vector.multi_reduction <add>, %92, %cst_44 [1] : vector<16x64xf32> to vector<16xf32>
    %94 = vector.shape_cast %93 : vector<16xf32> to vector<16x1xf32>
    %cst_45 = arith.constant 1.562500e-02 : f32
    %95 = vector.broadcast %cst_45 : f32 to vector<16x1xf32>
    %96 = arith.mulf %94, %95 : vector<16x1xf32>
    %97 = arith.mulf %91, %91 : vector<16x1xf32>
    %98 = arith.subf %96, %97 : vector<16x1xf32>
    %99 = vector.broadcast %91 : vector<16x1xf32> to vector<16x64xf32>
    %100 = arith.subf %85, %99 : vector<16x64xf32>
    %cst_46 = arith.constant 9.99999974E-6 : f32
    %101 = vector.broadcast %cst_46 : f32 to vector<16x1xf32>
    %102 = arith.addf %98, %101 : vector<16x1xf32>
    %103 = math.rsqrt %102 : vector<16x1xf32>
    %104 = vector.broadcast %103 : vector<16x1xf32> to vector<16x64xf32>
    %105 = arith.mulf %100, %104 : vector<16x64xf32>
    %106 = vector.broadcast %86 : vector<1x64xf32> to vector<16x64xf32>
    %107 = arith.mulf %105, %106 : vector<16x64xf32>
    %108 = vector.broadcast %87 : vector<1x64xf32> to vector<16x64xf32>
    %109 = arith.addf %107, %108 : vector<16x64xf32>
    %110 = arith.truncf %109 : vector<16x64xf32> to vector<16x64xbf16>
    %c1_47 = arith.constant 1 : index
    %c0_48 = arith.constant 0 : index
    %c0_49 = arith.constant 0 : index
    %111 = vector.load %arg4[%c1_47, %c0_48, %c0_49] : memref<4x64x128xbf16, #tpu.memory_space<vmem>>, vector<1x64x128xbf16>
    %112 = vector.shape_cast %111 : vector<1x64x128xbf16> to vector<64x128xbf16>
    %cst_50 = arith.constant dense<0.000000e+00> : vector<16x128xf32>
    %113 = tpu.matmul %110, %112, %cst_50 {dimension_numbers = #tpu.dot_dimension_numbers<[1], [0], [0], [1], [0, 0, 1, 1], [], []>} : vector<16x64xbf16>, vector<64x128xbf16>, vector<16x128xf32> -> vector<16x128xf32>
    %c11 = arith.constant 11 : index
    %c0_51 = arith.constant 0 : index
    %114 = vector.load %arg6[%c11, %c0_51] : memref<32x128xf32, #tpu.memory_space<vmem>>, vector<1x128xf32>
    %115 = vector.broadcast %114 : vector<1x128xf32> to vector<16x128xf32>
    %116 = arith.addf %113, %115 : vector<16x128xf32>
    %cst_52 = arith.constant 0.000000e+00 : f32
    %117 = vector.broadcast %cst_52 : f32 to vector<16x128xf32>
    %118 = arith.maximumf %116, %117 : vector<16x128xf32>
    %119 = arith.truncf %118 : vector<16x128xf32> to vector<16x128xbf16>
    %c1_53 = arith.constant 1 : index
    %c0_54 = arith.constant 0 : index
    %c0_55 = arith.constant 0 : index
    %120 = vector.load %arg5[%c1_53, %c0_54, %c0_55] : memref<4x128x64xbf16, #tpu.memory_space<vmem>>, vector<1x128x64xbf16>
    %121 = vector.shape_cast %120 : vector<1x128x64xbf16> to vector<128x64xbf16>
    %cst_56 = arith.constant dense<0.000000e+00> : vector<16x64xf32>
    %122 = tpu.matmul %119, %121, %cst_56 {dimension_numbers = #tpu.dot_dimension_numbers<[1], [0], [0], [1], [0, 0, 1, 1], [], []>} : vector<16x128xbf16>, vector<128x64xbf16>, vector<16x64xf32> -> vector<16x64xf32>
    %c12 = arith.constant 12 : index
    %c0_57 = arith.constant 0 : index
    %123 = vector.load %arg6[%c12, %c0_57] : memref<32x128xf32, #tpu.memory_space<vmem>>, vector<1x64xf32>
    %124 = vector.broadcast %123 : vector<1x64xf32> to vector<16x64xf32>
    %125 = arith.addf %122, %124 : vector<16x64xf32>
    %126 = arith.addf %109, %125 : vector<16x64xf32>
    %c13 = arith.constant 13 : index
    %c0_58 = arith.constant 0 : index
    %127 = vector.load %arg6[%c13, %c0_58] : memref<32x128xf32, #tpu.memory_space<vmem>>, vector<1x64xf32>
    %c14 = arith.constant 14 : index
    %c0_59 = arith.constant 0 : index
    %128 = vector.load %arg6[%c14, %c0_59] : memref<32x128xf32, #tpu.memory_space<vmem>>, vector<1x64xf32>
    %cst_60 = arith.constant dense<0.000000e+00> : vector<16xf32>
    %129 = vector.multi_reduction <add>, %126, %cst_60 [1] : vector<16x64xf32> to vector<16xf32>
    %130 = vector.shape_cast %129 : vector<16xf32> to vector<16x1xf32>
    %cst_61 = arith.constant 1.562500e-02 : f32
    %131 = vector.broadcast %cst_61 : f32 to vector<16x1xf32>
    %132 = arith.mulf %130, %131 : vector<16x1xf32>
    %133 = arith.mulf %126, %126 : vector<16x64xf32>
    %cst_62 = arith.constant dense<0.000000e+00> : vector<16xf32>
    %134 = vector.multi_reduction <add>, %133, %cst_62 [1] : vector<16x64xf32> to vector<16xf32>
    %135 = vector.shape_cast %134 : vector<16xf32> to vector<16x1xf32>
    %cst_63 = arith.constant 1.562500e-02 : f32
    %136 = vector.broadcast %cst_63 : f32 to vector<16x1xf32>
    %137 = arith.mulf %135, %136 : vector<16x1xf32>
    %138 = arith.mulf %132, %132 : vector<16x1xf32>
    %139 = arith.subf %137, %138 : vector<16x1xf32>
    %140 = vector.broadcast %132 : vector<16x1xf32> to vector<16x64xf32>
    %141 = arith.subf %126, %140 : vector<16x64xf32>
    %cst_64 = arith.constant 9.99999974E-6 : f32
    %142 = vector.broadcast %cst_64 : f32 to vector<16x1xf32>
    %143 = arith.addf %139, %142 : vector<16x1xf32>
    %144 = math.rsqrt %143 : vector<16x1xf32>
    %145 = vector.broadcast %144 : vector<16x1xf32> to vector<16x64xf32>
    %146 = arith.mulf %141, %145 : vector<16x64xf32>
    %147 = vector.broadcast %127 : vector<1x64xf32> to vector<16x64xf32>
    %148 = arith.mulf %146, %147 : vector<16x64xf32>
    %149 = vector.broadcast %128 : vector<1x64xf32> to vector<16x64xf32>
    %150 = arith.addf %148, %149 : vector<16x64xf32>
    %151 = arith.truncf %150 : vector<16x64xf32> to vector<16x64xbf16>
    %c2_65 = arith.constant 2 : index
    %c0_66 = arith.constant 0 : index
    %c0_67 = arith.constant 0 : index
    %152 = vector.load %arg3[%c2_65, %c0_66, %c0_67] : memref<4x64x64xbf16, #tpu.memory_space<vmem>>, vector<1x64x64xbf16>
    %153 = vector.shape_cast %152 : vector<1x64x64xbf16> to vector<64x64xbf16>
    %cst_68 = arith.constant dense<0.000000e+00> : vector<16x64xf32>
    %154 = tpu.matmul %151, %153, %cst_68 {dimension_numbers = #tpu.dot_dimension_numbers<[1], [0], [0], [1], [0, 0, 1, 1], [], []>} : vector<16x64xbf16>, vector<64x64xbf16>, vector<16x64xf32> -> vector<16x64xf32>
    %c15 = arith.constant 15 : index
    %c0_69 = arith.constant 0 : index
    %155 = vector.load %arg6[%c15, %c0_69] : memref<32x128xf32, #tpu.memory_space<vmem>>, vector<1x64xf32>
    %156 = vector.broadcast %155 : vector<1x64xf32> to vector<16x64xf32>
    %157 = arith.addf %154, %156 : vector<16x64xf32>
    %c16 = arith.constant 16 : index
    %c0_70 = arith.constant 0 : index
    %158 = vector.load %arg6[%c16, %c0_70] : memref<32x128xf32, #tpu.memory_space<vmem>>, vector<1x64xf32>
    %c17 = arith.constant 17 : index
    %c0_71 = arith.constant 0 : index
    %159 = vector.load %arg6[%c17, %c0_71] : memref<32x128xf32, #tpu.memory_space<vmem>>, vector<1x64xf32>
    %cst_72 = arith.constant dense<0.000000e+00> : vector<16xf32>
    %160 = vector.multi_reduction <add>, %157, %cst_72 [1] : vector<16x64xf32> to vector<16xf32>
    %161 = vector.shape_cast %160 : vector<16xf32> to vector<16x1xf32>
    %cst_73 = arith.constant 1.562500e-02 : f32
    %162 = vector.broadcast %cst_73 : f32 to vector<16x1xf32>
    %163 = arith.mulf %161, %162 : vector<16x1xf32>
    %164 = arith.mulf %157, %157 : vector<16x64xf32>
    %cst_74 = arith.constant dense<0.000000e+00> : vector<16xf32>
    %165 = vector.multi_reduction <add>, %164, %cst_74 [1] : vector<16x64xf32> to vector<16xf32>
    %166 = vector.shape_cast %165 : vector<16xf32> to vector<16x1xf32>
    %cst_75 = arith.constant 1.562500e-02 : f32
    %167 = vector.broadcast %cst_75 : f32 to vector<16x1xf32>
    %168 = arith.mulf %166, %167 : vector<16x1xf32>
    %169 = arith.mulf %163, %163 : vector<16x1xf32>
    %170 = arith.subf %168, %169 : vector<16x1xf32>
    %171 = vector.broadcast %163 : vector<16x1xf32> to vector<16x64xf32>
    %172 = arith.subf %157, %171 : vector<16x64xf32>
    %cst_76 = arith.constant 9.99999974E-6 : f32
    %173 = vector.broadcast %cst_76 : f32 to vector<16x1xf32>
    %174 = arith.addf %170, %173 : vector<16x1xf32>
    %175 = math.rsqrt %174 : vector<16x1xf32>
    %176 = vector.broadcast %175 : vector<16x1xf32> to vector<16x64xf32>
    %177 = arith.mulf %172, %176 : vector<16x64xf32>
    %178 = vector.broadcast %158 : vector<1x64xf32> to vector<16x64xf32>
    %179 = arith.mulf %177, %178 : vector<16x64xf32>
    %180 = vector.broadcast %159 : vector<1x64xf32> to vector<16x64xf32>
    %181 = arith.addf %179, %180 : vector<16x64xf32>
    %182 = arith.truncf %181 : vector<16x64xf32> to vector<16x64xbf16>
    %c2_77 = arith.constant 2 : index
    %c0_78 = arith.constant 0 : index
    %c0_79 = arith.constant 0 : index
    %183 = vector.load %arg4[%c2_77, %c0_78, %c0_79] : memref<4x64x128xbf16, #tpu.memory_space<vmem>>, vector<1x64x128xbf16>
    %184 = vector.shape_cast %183 : vector<1x64x128xbf16> to vector<64x128xbf16>
    %cst_80 = arith.constant dense<0.000000e+00> : vector<16x128xf32>
    %185 = tpu.matmul %182, %184, %cst_80 {dimension_numbers = #tpu.dot_dimension_numbers<[1], [0], [0], [1], [0, 0, 1, 1], [], []>} : vector<16x64xbf16>, vector<64x128xbf16>, vector<16x128xf32> -> vector<16x128xf32>
    %c18 = arith.constant 18 : index
    %c0_81 = arith.constant 0 : index
    %186 = vector.load %arg6[%c18, %c0_81] : memref<32x128xf32, #tpu.memory_space<vmem>>, vector<1x128xf32>
    %187 = vector.broadcast %186 : vector<1x128xf32> to vector<16x128xf32>
    %188 = arith.addf %185, %187 : vector<16x128xf32>
    %cst_82 = arith.constant 0.000000e+00 : f32
    %189 = vector.broadcast %cst_82 : f32 to vector<16x128xf32>
    %190 = arith.maximumf %188, %189 : vector<16x128xf32>
    %191 = arith.truncf %190 : vector<16x128xf32> to vector<16x128xbf16>
    %c2_83 = arith.constant 2 : index
    %c0_84 = arith.constant 0 : index
    %c0_85 = arith.constant 0 : index
    %192 = vector.load %arg5[%c2_83, %c0_84, %c0_85] : memref<4x128x64xbf16, #tpu.memory_space<vmem>>, vector<1x128x64xbf16>
    %193 = vector.shape_cast %192 : vector<1x128x64xbf16> to vector<128x64xbf16>
    %cst_86 = arith.constant dense<0.000000e+00> : vector<16x64xf32>
    %194 = tpu.matmul %191, %193, %cst_86 {dimension_numbers = #tpu.dot_dimension_numbers<[1], [0], [0], [1], [0, 0, 1, 1], [], []>} : vector<16x128xbf16>, vector<128x64xbf16>, vector<16x64xf32> -> vector<16x64xf32>
    %c19 = arith.constant 19 : index
    %c0_87 = arith.constant 0 : index
    %195 = vector.load %arg6[%c19, %c0_87] : memref<32x128xf32, #tpu.memory_space<vmem>>, vector<1x64xf32>
    %196 = vector.broadcast %195 : vector<1x64xf32> to vector<16x64xf32>
    %197 = arith.addf %194, %196 : vector<16x64xf32>
    %198 = arith.addf %181, %197 : vector<16x64xf32>
    %c20 = arith.constant 20 : index
    %c0_88 = arith.constant 0 : index
    %199 = vector.load %arg6[%c20, %c0_88] : memref<32x128xf32, #tpu.memory_space<vmem>>, vector<1x64xf32>
    %c21 = arith.constant 21 : index
    %c0_89 = arith.constant 0 : index
    %200 = vector.load %arg6[%c21, %c0_89] : memref<32x128xf32, #tpu.memory_space<vmem>>, vector<1x64xf32>
    %cst_90 = arith.constant dense<0.000000e+00> : vector<16xf32>
    %201 = vector.multi_reduction <add>, %198, %cst_90 [1] : vector<16x64xf32> to vector<16xf32>
    %202 = vector.shape_cast %201 : vector<16xf32> to vector<16x1xf32>
    %cst_91 = arith.constant 1.562500e-02 : f32
    %203 = vector.broadcast %cst_91 : f32 to vector<16x1xf32>
    %204 = arith.mulf %202, %203 : vector<16x1xf32>
    %205 = arith.mulf %198, %198 : vector<16x64xf32>
    %cst_92 = arith.constant dense<0.000000e+00> : vector<16xf32>
    %206 = vector.multi_reduction <add>, %205, %cst_92 [1] : vector<16x64xf32> to vector<16xf32>
    %207 = vector.shape_cast %206 : vector<16xf32> to vector<16x1xf32>
    %cst_93 = arith.constant 1.562500e-02 : f32
    %208 = vector.broadcast %cst_93 : f32 to vector<16x1xf32>
    %209 = arith.mulf %207, %208 : vector<16x1xf32>
    %210 = arith.mulf %204, %204 : vector<16x1xf32>
    %211 = arith.subf %209, %210 : vector<16x1xf32>
    %212 = vector.broadcast %204 : vector<16x1xf32> to vector<16x64xf32>
    %213 = arith.subf %198, %212 : vector<16x64xf32>
    %cst_94 = arith.constant 9.99999974E-6 : f32
    %214 = vector.broadcast %cst_94 : f32 to vector<16x1xf32>
    %215 = arith.addf %211, %214 : vector<16x1xf32>
    %216 = math.rsqrt %215 : vector<16x1xf32>
    %217 = vector.broadcast %216 : vector<16x1xf32> to vector<16x64xf32>
    %218 = arith.mulf %213, %217 : vector<16x64xf32>
    %219 = vector.broadcast %199 : vector<1x64xf32> to vector<16x64xf32>
    %220 = arith.mulf %218, %219 : vector<16x64xf32>
    %221 = vector.broadcast %200 : vector<1x64xf32> to vector<16x64xf32>
    %222 = arith.addf %220, %221 : vector<16x64xf32>
    %223 = arith.truncf %222 : vector<16x64xf32> to vector<16x64xbf16>
    %c3_95 = arith.constant 3 : index
    %c0_96 = arith.constant 0 : index
    %c0_97 = arith.constant 0 : index
    %224 = vector.load %arg3[%c3_95, %c0_96, %c0_97] : memref<4x64x64xbf16, #tpu.memory_space<vmem>>, vector<1x64x64xbf16>
    %225 = vector.shape_cast %224 : vector<1x64x64xbf16> to vector<64x64xbf16>
    %cst_98 = arith.constant dense<0.000000e+00> : vector<16x64xf32>
    %226 = tpu.matmul %223, %225, %cst_98 {dimension_numbers = #tpu.dot_dimension_numbers<[1], [0], [0], [1], [0, 0, 1, 1], [], []>} : vector<16x64xbf16>, vector<64x64xbf16>, vector<16x64xf32> -> vector<16x64xf32>
    %c22 = arith.constant 22 : index
    %c0_99 = arith.constant 0 : index
    %227 = vector.load %arg6[%c22, %c0_99] : memref<32x128xf32, #tpu.memory_space<vmem>>, vector<1x64xf32>
    %228 = vector.broadcast %227 : vector<1x64xf32> to vector<16x64xf32>
    %229 = arith.addf %226, %228 : vector<16x64xf32>
    %c23 = arith.constant 23 : index
    %c0_100 = arith.constant 0 : index
    %230 = vector.load %arg6[%c23, %c0_100] : memref<32x128xf32, #tpu.memory_space<vmem>>, vector<1x64xf32>
    %c24 = arith.constant 24 : index
    %c0_101 = arith.constant 0 : index
    %231 = vector.load %arg6[%c24, %c0_101] : memref<32x128xf32, #tpu.memory_space<vmem>>, vector<1x64xf32>
    %cst_102 = arith.constant dense<0.000000e+00> : vector<16xf32>
    %232 = vector.multi_reduction <add>, %229, %cst_102 [1] : vector<16x64xf32> to vector<16xf32>
    %233 = vector.shape_cast %232 : vector<16xf32> to vector<16x1xf32>
    %cst_103 = arith.constant 1.562500e-02 : f32
    %234 = vector.broadcast %cst_103 : f32 to vector<16x1xf32>
    %235 = arith.mulf %233, %234 : vector<16x1xf32>
    %236 = arith.mulf %229, %229 : vector<16x64xf32>
    %cst_104 = arith.constant dense<0.000000e+00> : vector<16xf32>
    %237 = vector.multi_reduction <add>, %236, %cst_104 [1] : vector<16x64xf32> to vector<16xf32>
    %238 = vector.shape_cast %237 : vector<16xf32> to vector<16x1xf32>
    %cst_105 = arith.constant 1.562500e-02 : f32
    %239 = vector.broadcast %cst_105 : f32 to vector<16x1xf32>
    %240 = arith.mulf %238, %239 : vector<16x1xf32>
    %241 = arith.mulf %235, %235 : vector<16x1xf32>
    %242 = arith.subf %240, %241 : vector<16x1xf32>
    %243 = vector.broadcast %235 : vector<16x1xf32> to vector<16x64xf32>
    %244 = arith.subf %229, %243 : vector<16x64xf32>
    %cst_106 = arith.constant 9.99999974E-6 : f32
    %245 = vector.broadcast %cst_106 : f32 to vector<16x1xf32>
    %246 = arith.addf %242, %245 : vector<16x1xf32>
    %247 = math.rsqrt %246 : vector<16x1xf32>
    %248 = vector.broadcast %247 : vector<16x1xf32> to vector<16x64xf32>
    %249 = arith.mulf %244, %248 : vector<16x64xf32>
    %250 = vector.broadcast %230 : vector<1x64xf32> to vector<16x64xf32>
    %251 = arith.mulf %249, %250 : vector<16x64xf32>
    %252 = vector.broadcast %231 : vector<1x64xf32> to vector<16x64xf32>
    %253 = arith.addf %251, %252 : vector<16x64xf32>
    %254 = arith.truncf %253 : vector<16x64xf32> to vector<16x64xbf16>
    %c3_107 = arith.constant 3 : index
    %c0_108 = arith.constant 0 : index
    %c0_109 = arith.constant 0 : index
    %255 = vector.load %arg4[%c3_107, %c0_108, %c0_109] : memref<4x64x128xbf16, #tpu.memory_space<vmem>>, vector<1x64x128xbf16>
    %256 = vector.shape_cast %255 : vector<1x64x128xbf16> to vector<64x128xbf16>
    %cst_110 = arith.constant dense<0.000000e+00> : vector<16x128xf32>
    %257 = tpu.matmul %254, %256, %cst_110 {dimension_numbers = #tpu.dot_dimension_numbers<[1], [0], [0], [1], [0, 0, 1, 1], [], []>} : vector<16x64xbf16>, vector<64x128xbf16>, vector<16x128xf32> -> vector<16x128xf32>
    %c25 = arith.constant 25 : index
    %c0_111 = arith.constant 0 : index
    %258 = vector.load %arg6[%c25, %c0_111] : memref<32x128xf32, #tpu.memory_space<vmem>>, vector<1x128xf32>
    %259 = vector.broadcast %258 : vector<1x128xf32> to vector<16x128xf32>
    %260 = arith.addf %257, %259 : vector<16x128xf32>
    %cst_112 = arith.constant 0.000000e+00 : f32
    %261 = vector.broadcast %cst_112 : f32 to vector<16x128xf32>
    %262 = arith.maximumf %260, %261 : vector<16x128xf32>
    %263 = arith.truncf %262 : vector<16x128xf32> to vector<16x128xbf16>
    %c3_113 = arith.constant 3 : index
    %c0_114 = arith.constant 0 : index
    %c0_115 = arith.constant 0 : index
    %264 = vector.load %arg5[%c3_113, %c0_114, %c0_115] : memref<4x128x64xbf16, #tpu.memory_space<vmem>>, vector<1x128x64xbf16>
    %265 = vector.shape_cast %264 : vector<1x128x64xbf16> to vector<128x64xbf16>
    %cst_116 = arith.constant dense<0.000000e+00> : vector<16x64xf32>
    %266 = tpu.matmul %263, %265, %cst_116 {dimension_numbers = #tpu.dot_dimension_numbers<[1], [0], [0], [1], [0, 0, 1, 1], [], []>} : vector<16x128xbf16>, vector<128x64xbf16>, vector<16x64xf32> -> vector<16x64xf32>
    %c26 = arith.constant 26 : index
    %c0_117 = arith.constant 0 : index
    %267 = vector.load %arg6[%c26, %c0_117] : memref<32x128xf32, #tpu.memory_space<vmem>>, vector<1x64xf32>
    %268 = vector.broadcast %267 : vector<1x64xf32> to vector<16x64xf32>
    %269 = arith.addf %266, %268 : vector<16x64xf32>
    %270 = arith.addf %253, %269 : vector<16x64xf32>
    %c27 = arith.constant 27 : index
    %c0_118 = arith.constant 0 : index
    %271 = vector.load %arg6[%c27, %c0_118] : memref<32x128xf32, #tpu.memory_space<vmem>>, vector<1x64xf32>
    %c28 = arith.constant 28 : index
    %c0_119 = arith.constant 0 : index
    %272 = vector.load %arg6[%c28, %c0_119] : memref<32x128xf32, #tpu.memory_space<vmem>>, vector<1x64xf32>
    %cst_120 = arith.constant dense<0.000000e+00> : vector<16xf32>
    %273 = vector.multi_reduction <add>, %270, %cst_120 [1] : vector<16x64xf32> to vector<16xf32>
    %274 = vector.shape_cast %273 : vector<16xf32> to vector<16x1xf32>
    %cst_121 = arith.constant 1.562500e-02 : f32
    %275 = vector.broadcast %cst_121 : f32 to vector<16x1xf32>
    %276 = arith.mulf %274, %275 : vector<16x1xf32>
    %277 = arith.mulf %270, %270 : vector<16x64xf32>
    %cst_122 = arith.constant dense<0.000000e+00> : vector<16xf32>
    %278 = vector.multi_reduction <add>, %277, %cst_122 [1] : vector<16x64xf32> to vector<16xf32>
    %279 = vector.shape_cast %278 : vector<16xf32> to vector<16x1xf32>
    %cst_123 = arith.constant 1.562500e-02 : f32
    %280 = vector.broadcast %cst_123 : f32 to vector<16x1xf32>
    %281 = arith.mulf %279, %280 : vector<16x1xf32>
    %282 = arith.mulf %276, %276 : vector<16x1xf32>
    %283 = arith.subf %281, %282 : vector<16x1xf32>
    %284 = vector.broadcast %276 : vector<16x1xf32> to vector<16x64xf32>
    %285 = arith.subf %270, %284 : vector<16x64xf32>
    %cst_124 = arith.constant 9.99999974E-6 : f32
    %286 = vector.broadcast %cst_124 : f32 to vector<16x1xf32>
    %287 = arith.addf %283, %286 : vector<16x1xf32>
    %288 = math.rsqrt %287 : vector<16x1xf32>
    %289 = vector.broadcast %288 : vector<16x1xf32> to vector<16x64xf32>
    %290 = arith.mulf %285, %289 : vector<16x64xf32>
    %291 = vector.broadcast %271 : vector<1x64xf32> to vector<16x64xf32>
    %292 = arith.mulf %290, %291 : vector<16x64xf32>
    %293 = vector.broadcast %272 : vector<1x64xf32> to vector<16x64xf32>
    %294 = arith.addf %292, %293 : vector<16x64xf32>
    %c29 = arith.constant 29 : index
    %c0_125 = arith.constant 0 : index
    %295 = vector.load %arg6[%c29, %c0_125] : memref<32x128xf32, #tpu.memory_space<vmem>>, vector<1x64xf32>
    %c29_126 = arith.constant 29 : index
    %c64 = arith.constant 64 : index
    %296 = vector.load %arg6[%c29_126, %c64] : memref<32x128xf32, #tpu.memory_space<vmem>>, vector<1x1xf32>
    %297 = vector.broadcast %295 : vector<1x64xf32> to vector<16x64xf32>
    %298 = arith.mulf %294, %297 : vector<16x64xf32>
    %cst_127 = arith.constant dense<0.000000e+00> : vector<16xf32>
    %299 = vector.multi_reduction <add>, %298, %cst_127 [1] : vector<16x64xf32> to vector<16xf32>
    %300 = vector.shape_cast %299 : vector<16xf32> to vector<16x1xf32>
    %301 = vector.broadcast %296 : vector<1x1xf32> to vector<16x1xf32>
    %302 = arith.addf %300, %301 : vector<16x1xf32>
    %303 = arith.negf %302 : vector<16x1xf32>
    %304 = math.exp %303 : vector<16x1xf32>
    %cst_128 = arith.constant 1.000000e+00 : f32
    %305 = vector.broadcast %cst_128 : f32 to vector<16x1xf32>
    %306 = arith.addf %305, %304 : vector<16x1xf32>
    %307 = arith.divf %305, %306 : vector<16x1xf32>
    %c0_129 = arith.constant 0 : index
    %c0_130 = arith.constant 0 : index
    %308 = vector.load %arg7[%c0_129, %c0_130] : memref<16x1xf32, #tpu.memory_space<vmem>>, vector<16x1xf32>
    tpu.vector_store %arg7[%c0_129, %c0_130], %307 {strides = array<i32>} : memref<16x1xf32, #tpu.memory_space<vmem>>, vector<16x1xf32>,
    return
  }
  func.func @transform_0(%arg0: i32) -> (i32, i32) {
    %c0_i32 = arith.constant 0 : i32
    %c0_i32_0 = arith.constant 0 : i32
    return %arg0, %c0_i32 : i32, i32
  }
  func.func @transform_1(%arg0: i32) -> (i32, i32) {
    %c0_i32 = arith.constant 0 : i32
    %c0_i32_0 = arith.constant 0 : i32
    %c0_i32_1 = arith.constant 0 : i32
    return %c0_i32, %c0_i32_0 : i32, i32
  }
  func.func @transform_2(%arg0: i32) -> (i32, i32, i32) {
    %c0_i32 = arith.constant 0 : i32
    %c0_i32_0 = arith.constant 0 : i32
    %c0_i32_1 = arith.constant 0 : i32
    %c0_i32_2 = arith.constant 0 : i32
    return %c0_i32, %c0_i32_0, %c0_i32_1 : i32, i32, i32
  }
  func.func @transform_3(%arg0: i32) -> (i32, i32, i32) {
    %c0_i32 = arith.constant 0 : i32
    %c0_i32_0 = arith.constant 0 : i32
    %c0_i32_1 = arith.constant 0 : i32
    %c0_i32_2 = arith.constant 0 : i32
    return %c0_i32, %c0_i32_0, %c0_i32_1 : i32, i32, i32
  }
  func.func @transform_4(%arg0: i32) -> (i32, i32, i32) {
    %c0_i32 = arith.constant 0 : i32
    %c0_i32_0 = arith.constant 0 : i32
    %c0_i32_1 = arith.constant 0 : i32
    %c0_i32_2 = arith.constant 0 : i32
    return %c0_i32, %c0_i32_0, %c0_i32_1 : i32, i32, i32
  }
  func.func @transform_5(%arg0: i32) -> (i32, i32) {
    %c0_i32 = arith.constant 0 : i32
    %c0_i32_0 = arith.constant 0 : i32
    %c0_i32_1 = arith.constant 0 : i32
    return %c0_i32, %c0_i32_0 : i32, i32
  }
  func.func @transform_6(%arg0: i32) -> (i32, i32) {
    %c0_i32 = arith.constant 0 : i32
    %c0_i32_0 = arith.constant 0 : i32
    return %arg0, %c0_i32 : i32, i32
  }
}

</mosaic_0001>

<llo_original>
// kernel: transformer_forward.1
$region0: #{transformer_forward.1}
  #allocation0 [shape = 'u32[]', space=smem, size = 0x4, offset = 0x4, fixed_abs, tag = 'smem constant byte address 0x4 - core index']
  #allocation1 [shape = 'u32[144,128]{1,0:T(1,128)}', space=vmem, size = 0x12000, scoped, tag = 'internal scratch']
  %s0 = inlined_call_operand.vmem [shape: f32[16,32], index: 0, kind: input, shape index: {}]
  %s1 = inlined_call_operand.vmem [shape: bf16[32,64], index: 1, kind: input, shape index: {}]
  %s2 = inlined_call_operand.vmem [shape: bf16[4,64,64], index: 2, kind: input, shape index: {}]
  %s3 = inlined_call_operand.vmem [shape: bf16[4,64,128], index: 3, kind: input, shape index: {}]
  %s4 = inlined_call_operand.vmem [shape: bf16[4,128,64], index: 4, kind: input, shape index: {}]
  %s5 = inlined_call_operand.vmem [shape: f32[32,128], index: 5, kind: input, shape index: {}]
  %s6 = inlined_call_operand.vmem [shape: f32[16,1], index: 6, kind: output, shape index: {}]
  %s7 = sld [smem:[#allocation0]]
  $region34: #{transformer_forward.1} parent=0
    _
  %s9 = ssub.s32 1, %s7
  %s10 = scalar_select 0, %s9, %s7
  // Predicated region
  $region2: #{transformer_forward.1} parent=0 // pred_check
    _
  $region3: #{transformer_forward.1} parent=0 // pred_check_branch
    %12 = sbr.rel (0) target = $region5
  $region4: #{transformer_forward.1} parent=0 // pred_region
    _
  $region5: #{transformer_forward.1} parent=0 // pred_fallthru
    _
  // Predicated region
  $region6: #{transformer_forward.1} parent=0 // pred_check
    _
  $region7: #{transformer_forward.1} parent=0 // pred_check_branch
    %14 = sbr.rel (0) target = $region9
  $region8: #{transformer_forward.1} parent=0 // pred_region
    _
  $region9: #{transformer_forward.1} parent=0 // pred_fallthru
    _
  // Predicated region
  $region10: #{transformer_forward.1} parent=0 // pred_check
    _
  $region11: #{transformer_forward.1} parent=0 // pred_check_branch
    %16 = sbr.rel (0) target = $region13
  $region12: #{transformer_forward.1} parent=0 // pred_region
    _
  $region13: #{transformer_forward.1} parent=0 // pred_fallthru
    _
  // Predicated region
  $region14: #{transformer_forward.1} parent=0 // pred_check
    _
  $region15: #{transformer_forward.1} parent=0 // pred_check_branch
    %18 = sbr.rel (0) target = $region17
  $region16: #{transformer_forward.1} parent=0 // pred_region
    _
  $region17: #{transformer_forward.1} parent=0 // pred_fallthru
    _
  // Predicated region
  $region18: #{transformer_forward.1} parent=0 // pred_check
    _
  $region19: #{transformer_forward.1} parent=0 // pred_check_branch
    %20 = sbr.rel (0) target = $region21
  $region20: #{transformer_forward.1} parent=0 // pred_region
    _
  $region21: #{transformer_forward.1} parent=0 // pred_fallthru
    _
  // Predicated region
  $region22: #{transformer_forward.1} parent=0 // pred_check
    _
  $region23: #{transformer_forward.1} parent=0 // pred_check_branch
    %22 = sbr.rel (0) target = $region25
  $region24: #{transformer_forward.1} parent=0 // pred_region
    _
  $region25: #{transformer_forward.1} parent=0 // pred_fallthru
    _
  %v24 = vld [vmem:[%s0] sm:$0xff]
  %v25 = vld [vmem:[%s0 + $0x8] sm:$0xff]
  %v26 = vpack.c.bf16 %v25, %v24
  %v27 = vld [vmem:[%s1] sm:$0xf]
  %v28 = vld [vmem:[%s1 + $0x4] sm:$0xf]
  %v29 = vld [vmem:[%s1 + $0x8] sm:$0xf]
  %v30 = vld [vmem:[%s1 + $0xc] sm:$0xf]
  %v31 = vld [vmem:[%s5] sm:$0x1]
  %v32 = vlaneseq
  %v33 = vshrl.u32 %v32, 7
  %v34 = vsub.s32 0, %v33
  %v35 = vrot.slane %v31, %v34
  %v40 = vunpack.c.l.b16 %v27
  %v41 = vunpack.c.l.b16 %v28
  %v42 = vunpack.c.l.b16 %v29
  %v43 = vunpack.c.l.b16 %v30
  %v44 = vpack.c.b16 %v41, %v40
  %v45 = vpack.c.b16 %v43, %v42
  %vm48 = vcmask 261120
  %v50 = vsel %vm48, %v26, 0
  %52 = vmatprep.subr.bf16.mxu0 0
  %53 = vmatpush1.bf16.msra.mxu0 %v44
  %54 = vmatprep.subr.bf16.mxu0 0
  %55 = vmatpush1.bf16.msra.mxu0 %v45
  %56 = vmatprep.subr.bf16.mxu0 0
  %57 = vmatpush1.bf16.msra.mxu0 0
  %58 = vmatprep.subr.bf16.mxu0 0
  %59 = vmatpush1.bf16.msra.mxu0 0
  %60 = vmatprep.subr.bf16.mxu0 0
  %61 = vmatpush1.bf16.msra.mxu0 0
  %62 = vmatprep.subr.bf16.mxu0 0
  %63 = vmatpush1.bf16.msra.mxu0 0
  %64 = vmatprep.subr.bf16.mxu0 0
  %65 = vmatpush1.bf16.msra.mxu0 0
  %66 = vmatprep.subr.bf16.mxu0 0
  %67 = vmatpush1.bf16.msra.mxu0 0
  %68 = vmatprep.subr.bf16.mxu0 0
  %69 = vmatpush1.bf16.msra.mxu0 0
  %70 = vmatprep.subr.bf16.mxu0 0
  %71 = vmatpush1.bf16.msra.mxu0 0
  %72 = vmatprep.subr.bf16.mxu0 0
  %73 = vmatpush1.bf16.msra.mxu0 0
  %74 = vmatprep.subr.bf16.mxu0 0
  %75 = vmatpush1.bf16.msra.mxu0 0
  %76 = vmatprep.subr.bf16.mxu0 0
  %77 = vmatpush1.bf16.msra.mxu0 0
  %78 = vmatprep.subr.bf16.mxu0 0
  %79 = vmatpush1.bf16.msra.mxu0 0
  %80 = vmatprep.subr.bf16.mxu0 0
  %81 = vmatpush1.bf16.msra.mxu0 0
  %82 = vmatprep.subr.bf16.mxu0 0
  %83 = vmatpush1.bf16.msra.mxu0 0
  %84 = vmatprep.mubr.bf16.mxu0 0
  %85 = vmatmul.mubr.bf16.gmra.mrb[0].mxu0 %v50
  %v86 = vpop.f32.mrb[0].mxu0
  %v87 = vadd.f32 %v35, %v86
  %v88 = vpop.f32.mrb[0].mxu0
  %v89 = vpop.f32.mrb[0].mxu0
  %v90 = vadd.f32 %v35, %v89
  %v91 = vpop.f32.mrb[0].mxu0
  %92 = vdwg.mxu0
  %v93 = vpack.c.bf16 %v90, %v87
  %v94 = vld [vmem:[%s2] sm:$0xf]
  %v95 = vld [vmem:[%s2 + $0x4] sm:$0xf]
  %v96 = vld [vmem:[%s2 + $0x8] sm:$0xf]
  %v97 = vld [vmem:[%s2 + $0xc] sm:$0xf]
  %v98 = vld [vmem:[%s2 + $0x10] sm:$0xf]
  %v99 = vld [vmem:[%s2 + $0x14] sm:$0xf]
  %v100 = vld [vmem:[%s2 + $0x18] sm:$0xf]
  %v101 = vld [vmem:[%s2 + $0x1c] sm:$0xf]
  %v102 = vld [vmem:[%s5 + $0x1] sm:$0x1]
  %v103 = vlaneseq
  %v104 = vshrl.u32 %v103, 7
  %v105 = vsub.s32 0, %v104
  %v106 = vrot.slane %v102, %v105
  %v115 = vunpack.c.l.b16 %v94
  %v116 = vunpack.c.l.b16 %v95
  %v117 = vunpack.c.l.b16 %v96
  %v118 = vunpack.c.l.b16 %v97
  %v119 = vunpack.c.l.b16 %v98
  %v120 = vunpack.c.l.b16 %v99
  %v121 = vunpack.c.l.b16 %v100
  %v122 = vunpack.c.l.b16 %v101
  %v123 = vpack.c.b16 %v116, %v115
  %v124 = vpack.c.b16 %v118, %v117
  %v125 = vpack.c.b16 %v120, %v119
  %v126 = vpack.c.b16 %v122, %v121
  %vm131 = vcmask 523264
  %v133 = vsel %vm131, %v93, 0
  %135 = vmatprep.subr.bf16.mxu0 0
  %136 = vmatpush1.bf16.msra.mxu0 %v123
  %137 = vmatprep.subr.bf16.mxu0 0
  %138 = vmatpush1.bf16.msra.mxu0 %v124
  %139 = vmatprep.subr.bf16.mxu0 0
  %140 = vmatpush1.bf16.msra.mxu0 %v125
  %141 = vmatprep.subr.bf16.mxu0 0
  %142 = vmatpush1.bf16.msra.mxu0 %v126
  %143 = vmatprep.subr.bf16.mxu0 0
  %144 = vmatpush1.bf16.msra.mxu0 0
  %145 = vmatprep.subr.bf16.mxu0 0
  %146 = vmatpush1.bf16.msra.mxu0 0
  %147 = vmatprep.subr.bf16.mxu0 0
  %148 = vmatpush1.bf16.msra.mxu0 0
  %149 = vmatprep.subr.bf16.mxu0 0
  %150 = vmatpush1.bf16.msra.mxu0 0
  %151 = vmatprep.subr.bf16.mxu0 0
  %152 = vmatpush1.bf16.msra.mxu0 0
  %153 = vmatprep.subr.bf16.mxu0 0
  %154 = vmatpush1.bf16.msra.mxu0 0
  %155 = vmatprep.subr.bf16.mxu0 0
  %156 = vmatpush1.bf16.msra.mxu0 0
  %157 = vmatprep.subr.bf16.mxu0 0
  %158 = vmatpush1.bf16.msra.mxu0 0
  %159 = vmatprep.subr.bf16.mxu0 0
  %160 = vmatpush1.bf16.msra.mxu0 0
  %161 = vmatprep.subr.bf16.mxu0 0
  %162 = vmatpush1.bf16.msra.mxu0 0
  %163 = vmatprep.subr.bf16.mxu0 0
  %164 = vmatpush1.bf16.msra.mxu0 0
  %165 = vmatprep.subr.bf16.mxu0 0
  %166 = vmatpush1.bf16.msra.mxu0 0
  %167 = vmatprep.mubr.bf16.mxu0 0
  %168 = vmatmul.mubr.bf16.gmra.mrb[0].mxu0 %v133
  %v169 = vpop.f32.mrb[0].mxu0
  %v170 = vadd.f32 %v106, %v169
  %v171 = vpop.f32.mrb[0].mxu0
  %v172 = vpop.f32.mrb[0].mxu0
  %v173 = vadd.f32 %v106, %v172
  %v174 = vpop.f32.mrb[0].mxu0
  %175 = vdwg.mxu0
  %v176 = vld [vmem:[%s5 + $0x2] sm:$0x1]
  %v177 = vld [vmem:[%s5 + $0x3] sm:$0x1]
  %v178 = vsel %vm131, %v170, 0.0
  %179 = vadd.xlane.f32.xlu0 %v178
  %v180 = vpop.xlane.xlu0 %179
  %v181 = vsel %vm131, %v173, 0.0
  %182 = vadd.xlane.f32.xlu0 %v181
  %v183 = vpop.xlane.xlu0 %182
  %v184 = vmul.f32 %v180, 0.015625
  %v185 = vmul.f32 %v183, 0.015625
  %v186 = vmul.f32 %v170, %v170
  %v187 = vmul.f32 %v173, %v173
  %v188 = vsel %vm131, %v186, 0.0
  %189 = vadd.xlane.f32.xlu0 %v188
  %v190 = vpop.xlane.xlu0 %189
  %v191 = vsel %vm131, %v187, 0.0
  %192 = vadd.xlane.f32.xlu0 %v191
  %v193 = vpop.xlane.xlu0 %192
  %v194 = vmul.f32 %v190, 0.015625
  %v195 = vmul.f32 %v193, 0.015625
  %v196 = vmul.f32 %v184, %v184
  %v197 = vmul.f32 %v185, %v185
  %v198 = vsub.f32 %v194, %v196
  %v199 = vsub.f32 %v195, %v197
  %v200 = vsub.f32 %v170, %v184
  %v201 = vsub.f32 %v173, %v185
  %v202 = vadd.f32 %v198, 1e-05
  %v203 = vadd.f32 %v199, 1e-05
  %v204 = vrsqrt.pop %v202
  %v205 = vrsqrt.pop %v203
  %v206 = vmul.f32 %v200, %v204
  %v207 = vmul.f32 %v201, %v205
  %v208 = vlaneseq
  %v209 = vshrl.u32 %v208, 7
  %v210 = vsub.s32 0, %v209
  %v211 = vrot.slane %v176, %v210
  %v212 = vmul.f32 %v206, %v211
  %v213 = vmul.f32 %v207, %v211
  %v214 = vlaneseq
  %v215 = vshrl.u32 %v214, 7
  %v216 = vsub.s32 0, %v215
  %v217 = vrot.slane %v177, %v216
  %v218 = vadd.f32 %v212, %v217
  %v219 = vadd.f32 %v213, %v217
  %v220 = vpack.c.bf16 %v219, %v218
  %v221 = vld [vmem:[%s3] sm:$0xf]
  %v222 = vld [vmem:[%s3 + $0x4] sm:$0xf]
  %v223 = vld [vmem:[%s3 + $0x8] sm:$0xf]
  %v224 = vld [vmem:[%s3 + $0xc] sm:$0xf]
  %v225 = vld [vmem:[%s3 + $0x10] sm:$0xf]
  %v226 = vld [vmem:[%s3 + $0x14] sm:$0xf]
  %v227 = vld [vmem:[%s3 + $0x18] sm:$0xf]
  %v228 = vld [vmem:[%s3 + $0x1c] sm:$0xf]
  %v229 = vld [vmem:[%s5 + $0x4] sm:$0x1]
  %v230 = vlaneseq
  %v231 = vshrl.u32 %v230, 7
  %v232 = vsub.s32 0, %v231
  %v233 = vrot.slane %v229, %v232
  %v242 = vunpack.c.l.b16 %v221
  %v243 = vunpack.c.l.b16 %v222
  %v244 = vunpack.c.l.b16 %v223
  %v245 = vunpack.c.l.b16 %v224
  %v246 = vunpack.c.l.b16 %v225
  %v247 = vunpack.c.l.b16 %v226
  %v248 = vunpack.c.l.b16 %v227
  %v249 = vunpack.c.l.b16 %v228
  %v250 = vpack.c.b16 %v243, %v242
  %v251 = vpack.c.b16 %v245, %v244
  %v252 = vpack.c.b16 %v247, %v246
  %v253 = vpack.c.b16 %v249, %v248
  %v259 = vsel %vm131, %v220, 0
  %261 = vmatprep.subr.bf16.mxu0 0
  %262 = vmatpush1.bf16.msra.mxu0 %v250
  %263 = vmatprep.subr.bf16.mxu0 0
  %264 = vmatpush1.bf16.msra.mxu0 %v251
  %265 = vmatprep.subr.bf16.mxu0 0
  %266 = vmatpush1.bf16.msra.mxu0 %v252
  %267 = vmatprep.subr.bf16.mxu0 0
  %268 = vmatpush1.bf16.msra.mxu0 %v253
  %269 = vmatprep.subr.bf16.mxu0 0
  %270 = vmatpush1.bf16.msra.mxu0 0
  %271 = vmatprep.subr.bf16.mxu0 0
  %272 = vmatpush1.bf16.msra.mxu0 0
  %273 = vmatprep.subr.bf16.mxu0 0
  %274 = vmatpush1.bf16.msra.mxu0 0
  %275 = vmatprep.subr.bf16.mxu0 0
  %276 = vmatpush1.bf16.msra.mxu0 0
  %277 = vmatprep.subr.bf16.mxu0 0
  %278 = vmatpush1.bf16.msra.mxu0 0
  %279 = vmatprep.subr.bf16.mxu0 0
  %280 = vmatpush1.bf16.msra.mxu0 0
  %281 = vmatprep.subr.bf16.mxu0 0
  %282 = vmatpush1.bf16.msra.mxu0 0
  %283 = vmatprep.subr.bf16.mxu0 0
  %284 = vmatpush1.bf16.msra.mxu0 0
  %285 = vmatprep.subr.bf16.mxu0 0
  %286 = vmatpush1.bf16.msra.mxu0 0
  %287 = vmatprep.subr.bf16.mxu0 0
  %288 = vmatpush1.bf16.msra.mxu0 0
  %289 = vmatprep.subr.bf16.mxu0 0
  %290 = vmatpush1.bf16.msra.mxu0 0
  %291 = vmatprep.subr.bf16.mxu0 0
  %292 = vmatpush1.bf16.msra.mxu0 0
  %293 = vmatprep.mubr.bf16.mxu0 0
  %294 = vmatmul.mubr.bf16.gmra.mrb[0].mxu0 %v259
  %v295 = vpop.f32.mrb[0].mxu0
  %v296 = vadd.f32 %v233, %v295
  %v297 = vpop.f32.mrb[0].mxu0
  %v298 = vpop.f32.mrb[0].mxu0
  %v299 = vadd.f32 %v233, %v298
  %v300 = vpop.f32.mrb[0].mxu0
  %301 = vdwg.mxu0
  %v302 = vmax.f32 %v296, 0.0
  %v303 = vmax.f32 %v299, 0.0
  %v304 = vpack.c.bf16 %v303, %v302
  %v305 = vld [vmem:[%s4] sm:$0xf]
  %v306 = vld [vmem:[%s4 + $0x4] sm:$0xf]
  %v307 = vld [vmem:[%s4 + $0x8] sm:$0xf]
  %v308 = vld [vmem:[%s4 + $0xc] sm:$0xf]
  %v309 = vld [vmem:[%s4 + $0x10] sm:$0xf]
  %v310 = vld [vmem:[%s4 + $0x14] sm:$0xf]
  %v311 = vld [vmem:[%s4 + $0x18] sm:$0xf]
  %v312 = vld [vmem:[%s4 + $0x1c] sm:$0xf]
  %v313 = vld [vmem:[%s4 + $0x20] sm:$0xf]
  %v314 = vld [vmem:[%s4 + $0x24] sm:$0xf]
  %v315 = vld [vmem:[%s4 + $0x28] sm:$0xf]
  %v316 = vld [vmem:[%s4 + $0x2c] sm:$0xf]
  %v317 = vld [vmem:[%s4 + $0x30] sm:$0xf]
  %v318 = vld [vmem:[%s4 + $0x34] sm:$0xf]
  %v319 = vld [vmem:[%s4 + $0x38] sm:$0xf]
  %v320 = vld [vmem:[%s4 + $0x3c] sm:$0xf]
  %v321 = vld [vmem:[%s5 + $0x5] sm:$0x1]
  %v322 = vlaneseq
  %v323 = vshrl.u32 %v322, 7
  %v324 = vsub.s32 0, %v323
  %v325 = vrot.slane %v321, %v324
  %v342 = vunpack.c.l.b16 %v305
  %v343 = vunpack.c.l.b16 %v306
  %v344 = vunpack.c.l.b16 %v307
  %v345 = vunpack.c.l.b16 %v308
  %v346 = vunpack.c.l.b16 %v309
  %v347 = vunpack.c.l.b16 %v310
  %v348 = vunpack.c.l.b16 %v311
  %v349 = vunpack.c.l.b16 %v312
  %v350 = vunpack.c.l.b16 %v313
  %v351 = vunpack.c.l.b16 %v314
  %v352 = vunpack.c.l.b16 %v315
  %v353 = vunpack.c.l.b16 %v316
  %v354 = vunpack.c.l.b16 %v317
  %v355 = vunpack.c.l.b16 %v318
  %v356 = vunpack.c.l.b16 %v319
  %v357 = vunpack.c.l.b16 %v320
  %v358 = vpack.c.b16 %v343, %v342
  %v359 = vpack.c.b16 %v345, %v344
  %v360 = vpack.c.b16 %v347, %v346
  %v361 = vpack.c.b16 %v349, %v348
  %v362 = vpack.c.b16 %v351, %v350
  %v363 = vpack.c.b16 %v353, %v352
  %v364 = vpack.c.b16 %v355, %v354
  %v365 = vpack.c.b16 %v357, %v356
  %374 = vmatprep.subr.bf16.mxu0 0
  %375 = vmatpush1.bf16.msra.mxu0 %v358
  %376 = vmatprep.subr.bf16.mxu0 0
  %377 = vmatpush1.bf16.msra.mxu0 %v359
  %378 = vmatprep.subr.bf16.mxu0 0
  %379 = vmatpush1.bf16.msra.mxu0 %v360
  %380 = vmatprep.subr.bf16.mxu0 0
  %381 = vmatpush1.bf16.msra.mxu0 %v361
  %382 = vmatprep.subr.bf16.mxu0 0
  %383 = vmatpush1.bf16.msra.mxu0 %v362
  %384 = vmatprep.subr.bf16.mxu0 0
  %385 = vmatpush1.bf16.msra.mxu0 %v363
  %386 = vmatprep.subr.bf16.mxu0 0
  %387 = vmatpush1.bf16.msra.mxu0 %v364
  %388 = vmatprep.subr.bf16.mxu0 0
  %389 = vmatpush1.bf16.msra.mxu0 %v365
  %390 = vmatprep.subr.bf16.mxu0 0
  %391 = vmatpush1.bf16.msra.mxu0 0
  %392 = vmatprep.subr.bf16.mxu0 0
  %393 = vmatpush1.bf16.msra.mxu0 0
  %394 = vmatprep.subr.bf16.mxu0 0
  %395 = vmatpush1.bf16.msra.mxu0 0
  %396 = vmatprep.subr.bf16.mxu0 0
  %397 = vmatpush1.bf16.msra.mxu0 0
  %398 = vmatprep.subr.bf16.mxu0 0
  %399 = vmatpush1.bf16.msra.mxu0 0
  %400 = vmatprep.subr.bf16.mxu0 0
  %401 = vmatpush1.bf16.msra.mxu0 0
  %402 = vmatprep.subr.bf16.mxu0 0
  %403 = vmatpush1.bf16.msra.mxu0 0
  %404 = vmatprep.subr.bf16.mxu0 0
  %405 = vmatpush1.bf16.msra.mxu0 0
  %406 = vmatprep.mubr.bf16.mxu0 0
  %407 = vmatmul.mubr.bf16.gmra.mrb[0].mxu0 %v304
  %v408 = vpop.f32.mrb[0].mxu0
  %v409 = vadd.f32 %v325, %v408
  %v410 = vpop.f32.mrb[0].mxu0
  %v411 = vpop.f32.mrb[0].mxu0
  %v412 = vadd.f32 %v325, %v411
  %v413 = vpop.f32.mrb[0].mxu0
  %414 = vdwg.mxu0
  %v415 = vadd.f32 %v218, %v409
  %v416 = vadd.f32 %v219, %v412
  %v417 = vld [vmem:[%s5 + $0x6] sm:$0x1]
  %v418 = vld [vmem:[%s5 + $0x7] sm:$0x1]
  %v419 = vsel %vm131, %v415, 0.0
  %420 = vadd.xlane.f32.xlu0 %v419
  %v421 = vpop.xlane.xlu0 %420
  %v422 = vsel %vm131, %v416, 0.0
  %423 = vadd.xlane.f32.xlu0 %v422
  %v424 = vpop.xlane.xlu0 %423
  %v425 = vmul.f32 %v421, 0.015625
  %v426 = vmul.f32 %v424, 0.015625
  %v427 = vmul.f32 %v415, %v415
  %v428 = vmul.f32 %v416, %v416
  %v429 = vsel %vm131, %v427, 0.0
  %430 = vadd.xlane.f32.xlu0 %v429
  %v431 = vpop.xlane.xlu0 %430
  %v432 = vsel %vm131, %v428, 0.0
  %433 = vadd.xlane.f32.xlu0 %v432
  %v434 = vpop.xlane.xlu0 %433
  %v435 = vmul.f32 %v431, 0.015625
  %v436 = vmul.f32 %v434, 0.015625
  %v437 = vmul.f32 %v425, %v425
  %v438 = vmul.f32 %v426, %v426
  %v439 = vsub.f32 %v435, %v437
  %v440 = vsub.f32 %v436, %v438
  %v441 = vsub.f32 %v415, %v425
  %v442 = vsub.f32 %v416, %v426
  %v443 = vadd.f32 %v439, 1e-05
  %v444 = vadd.f32 %v440, 1e-05
  %v445 = vrsqrt.pop %v443
  %v446 = vrsqrt.pop %v444
  %v447 = vmul.f32 %v441, %v445
  %v448 = vmul.f32 %v442, %v446
  %v449 = vlaneseq
  %v450 = vshrl.u32 %v449, 7
  %v451 = vsub.s32 0, %v450
  %v452 = vrot.slane %v417, %v451
  %v453 = vmul.f32 %v447, %v452
  %v454 = vmul.f32 %v448, %v452
  %v455 = vlaneseq
  %v456 = vshrl.u32 %v455, 7
  %v457 = vsub.s32 0, %v456
  %v458 = vrot.slane %v418, %v457
  %v459 = vadd.f32 %v453, %v458
  %v460 = vadd.f32 %v454, %v458
  %v461 = vpack.c.bf16 %v460, %v459
  %s462 = scalar_lea.vmem %s2, 32
  %v463 = vld [vmem:[%s462] sm:$0xf]
  %v464 = vld [vmem:[%s462 + $0x4] sm:$0xf]
  %v465 = vld [vmem:[%s462 + $0x8] sm:$0xf]
  %v466 = vld [vmem:[%s462 + $0xc] sm:$0xf]
  %v467 = vld [vmem:[%s462 + $0x10] sm:$0xf]
  %v468 = vld [vmem:[%s462 + $0x14] sm:$0xf]
  %v469 = vld [vmem:[%s462 + $0x18] sm:$0xf]
  %v470 = vld [vmem:[%s462 + $0x1c] sm:$0xf]
  %v471 = vld [vmem:[%s5 + $0x8] sm:$0x1]
  %v472 = vlaneseq
  %v473 = vshrl.u32 %v472, 7
  %v474 = vsub.s32 0, %v473
  %v475 = vrot.slane %v471, %v474
  %v484 = vunpack.c.l.b16 %v463
  %v485 = vunpack.c.l.b16 %v464
  %v486 = vunpack.c.l.b16 %v465
  %v487 = vunpack.c.l.b16 %v466
  %v488 = vunpack.c.l.b16 %v467
  %v489 = vunpack.c.l.b16 %v468
  %v490 = vunpack.c.l.b16 %v469
  %v491 = vunpack.c.l.b16 %v470
  %v492 = vpack.c.b16 %v485, %v484
  %v493 = vpack.c.b16 %v487, %v486
  %v494 = vpack.c.b16 %v489, %v488
  %v495 = vpack.c.b16 %v491, %v490
  %v501 = vsel %vm131, %v461, 0
  %503 = vmatprep.subr.bf16.mxu0 0
  %504 = vmatpush1.bf16.msra.mxu0 %v492
  %505 = vmatprep.subr.bf16.mxu0 0
  %506 = vmatpush1.bf16.msra.mxu0 %v493
  %507 = vmatprep.subr.bf16.mxu0 0
  %508 = vmatpush1.bf16.msra.mxu0 %v494
  %509 = vmatprep.subr.bf16.mxu0 0
  %510 = vmatpush1.bf16.msra.mxu0 %v495
  %511 = vmatprep.subr.bf16.mxu0 0
  %512 = vmatpush1.bf16.msra.mxu0 0
  %513 = vmatprep.subr.bf16.mxu0 0
  %514 = vmatpush1.bf16.msra.mxu0 0
  %515 = vmatprep.subr.bf16.mxu0 0
  %516 = vmatpush1.bf16.msra.mxu0 0
  %517 = vmatprep.subr.bf16.mxu0 0
  %518 = vmatpush1.bf16.msra.mxu0 0
  %519 = vmatprep.subr.bf16.mxu0 0
  %520 = vmatpush1.bf16.msra.mxu0 0
  %521 = vmatprep.subr.bf16.mxu0 0
  %522 = vmatpush1.bf16.msra.mxu0 0
  %523 = vmatprep.subr.bf16.mxu0 0
  %524 = vmatpush1.bf16.msra.mxu0 0
  %525 = vmatprep.subr.bf16.mxu0 0
  %526 = vmatpush1.bf16.msra.mxu0 0
  %527 = vmatprep.subr.bf16.mxu0 0
  %528 = vmatpush1.bf16.msra.mxu0 0
  %529 = vmatprep.subr.bf16.mxu0 0
  %530 = vmatpush1.bf16.msra.mxu0 0
  %531 = vmatprep.subr.bf16.mxu0 0
  %532 = vmatpush1.bf16.msra.mxu0 0
  %533 = vmatprep.subr.bf16.mxu0 0
  %534 = vmatpush1.bf16.msra.mxu0 0
  %535 = vmatprep.mubr.bf16.mxu0 0
  %536 = vmatmul.mubr.bf16.gmra.mrb[0].mxu0 %v501
  %v537 = vpop.f32.mrb[0].mxu0
  %v538 = vadd.f32 %v475, %v537
  %v539 = vpop.f32.mrb[0].mxu0
  %v540 = vpop.f32.mrb[0].mxu0
  %v541 = vadd.f32 %v475, %v540
  %v542 = vpop.f32.mrb[0].mxu0
  %543 = vdwg.mxu0
  %v544 = vld [vmem:[%s5 + $0x9] sm:$0x1]
  %v545 = vld [vmem:[%s5 + $0xa] sm:$0x1]
  %v546 = vsel %vm131, %v538, 0.0
  %547 = vadd.xlane.f32.xlu0 %v546
  %v548 = vpop.xlane.xlu0 %547
  %v549 = vsel %vm131, %v541, 0.0
  %550 = vadd.xlane.f32.xlu0 %v549
  %v551 = vpop.xlane.xlu0 %550
  %v552 = vmul.f32 %v548, 0.015625
  %v553 = vmul.f32 %v551, 0.015625
  %v554 = vmul.f32 %v538, %v538
  %v555 = vmul.f32 %v541, %v541
  %v556 = vsel %vm131, %v554, 0.0
  %557 = vadd.xlane.f32.xlu0 %v556
  %v558 = vpop.xlane.xlu0 %557
  %v559 = vsel %vm131, %v555, 0.0
  %560 = vadd.xlane.f32.xlu0 %v559
  %v561 = vpop.xlane.xlu0 %560
  %v562 = vmul.f32 %v558, 0.015625
  %v563 = vmul.f32 %v561, 0.015625
  %v564 = vmul.f32 %v552, %v552
  %v565 = vmul.f32 %v553, %v553
  %v566 = vsub.f32 %v562, %v564
  %v567 = vsub.f32 %v563, %v565
  %v568 = vsub.f32 %v538, %v552
  %v569 = vsub.f32 %v541, %v553
  %v570 = vadd.f32 %v566, 1e-05
  %v571 = vadd.f32 %v567, 1e-05
  %v572 = vrsqrt.pop %v570
  %v573 = vrsqrt.pop %v571
  %v574 = vmul.f32 %v568, %v572
  %v575 = vmul.f32 %v569, %v573
  %v576 = vlaneseq
  %v577 = vshrl.u32 %v576, 7
  %v578 = vsub.s32 0, %v577
  %v579 = vrot.slane %v544, %v578
  %v580 = vmul.f32 %v574, %v579
  %v581 = vmul.f32 %v575, %v579
  %v582 = vlaneseq
  %v583 = vshrl.u32 %v582, 7
  %v584 = vsub.s32 0, %v583
  %v585 = vrot.slane %v545, %v584
  %v586 = vadd.f32 %v580, %v585
  %v587 = vadd.f32 %v581, %v585
  %v588 = vpack.c.bf16 %v587, %v586
  %s589 = scalar_lea.vmem %s3, 32
  %v590 = vld [vmem:[%s589] sm:$0xf]
  %v591 = vld [vmem:[%s589 + $0x4] sm:$0xf]
  %v592 = vld [vmem:[%s589 + $0x8] sm:$0xf]
  %v593 = vld [vmem:[%s589 + $0xc] sm:$0xf]
  %v594 = vld [vmem:[%s589 + $0x10] sm:$0xf]
  %v595 = vld [vmem:[%s589 + $0x14] sm:$0xf]
  %v596 = vld [vmem:[%s589 + $0x18] sm:$0xf]
  %v597 = vld [vmem:[%s589 + $0x1c] sm:$0xf]
  %v598 = vld [vmem:[%s5 + $0xb] sm:$0x1]
  %v599 = vlaneseq
  %v600 = vshrl.u32 %v599, 7
  %v601 = vsub.s32 0, %v600
  %v602 = vrot.slane %v598, %v601
  %v611 = vunpack.c.l.b16 %v590
  %v612 = vunpack.c.l.b16 %v591
  %v613 = vunpack.c.l.b16 %v592
  %v614 = vunpack.c.l.b16 %v593
  %v615 = vunpack.c.l.b16 %v594
  %v616 = vunpack.c.l.b16 %v595
  %v617 = vunpack.c.l.b16 %v596
  %v618 = vunpack.c.l.b16 %v597
  %v619 = vpack.c.b16 %v612, %v611
  %v620 = vpack.c.b16 %v614, %v613
  %v621 = vpack.c.b16 %v616, %v615
  %v622 = vpack.c.b16 %v618, %v617
  %v628 = vsel %vm131, %v588, 0
  %630 = vmatprep.subr.bf16.mxu0 0
  %631 = vmatpush1.bf16.msra.mxu0 %v619
  %632 = vmatprep.subr.bf16.mxu0 0
  %633 = vmatpush1.bf16.msra.mxu0 %v620
  %634 = vmatprep.subr.bf16.mxu0 0
  %635 = vmatpush1.bf16.msra.mxu0 %v621
  %636 = vmatprep.subr.bf16.mxu0 0
  %637 = vmatpush1.bf16.msra.mxu0 %v622
  %638 = vmatprep.subr.bf16.mxu0 0
  %639 = vmatpush1.bf16.msra.mxu0 0
  %640 = vmatprep.subr.bf16.mxu0 0
  %641 = vmatpush1.bf16.msra.mxu0 0
  %642 = vmatprep.subr.bf16.mxu0 0
  %643 = vmatpush1.bf16.msra.mxu0 0
  %644 = vmatprep.subr.bf16.mxu0 0
  %645 = vmatpush1.bf16.msra.mxu0 0
  %646 = vmatprep.subr.bf16.mxu0 0
  %647 = vmatpush1.bf16.msra.mxu0 0
  %648 = vmatprep.subr.bf16.mxu0 0
  %649 = vmatpush1.bf16.msra.mxu0 0
  %650 = vmatprep.subr.bf16.mxu0 0
  %651 = vmatpush1.bf16.msra.mxu0 0
  %652 = vmatprep.subr.bf16.mxu0 0
  %653 = vmatpush1.bf16.msra.mxu0 0
  %654 = vmatprep.subr.bf16.mxu0 0
  %655 = vmatpush1.bf16.msra.mxu0 0
  %656 = vmatprep.subr.bf16.mxu0 0
  %657 = vmatpush1.bf16.msra.mxu0 0
  %658 = vmatprep.subr.bf16.mxu0 0
  %659 = vmatpush1.bf16.msra.mxu0 0
  %660 = vmatprep.subr.bf16.mxu0 0
  %661 = vmatpush1.bf16.msra.mxu0 0
  %662 = vmatprep.mubr.bf16.mxu0 0
  %663 = vmatmul.mubr.bf16.gmra.mrb[0].mxu0 %v628
  %v664 = vpop.f32.mrb[0].mxu0
  %v665 = vadd.f32 %v602, %v664
  %v666 = vpop.f32.mrb[0].mxu0
  %v667 = vpop.f32.mrb[0].mxu0
  %v668 = vadd.f32 %v602, %v667
  %v669 = vpop.f32.mrb[0].mxu0
  %670 = vdwg.mxu0
  %v671 = vmax.f32 %v665, 0.0
  %v672 = vmax.f32 %v668, 0.0
  %v673 = vpack.c.bf16 %v672, %v671
  %s674 = scalar_lea.vmem %s4, 64
  %v675 = vld [vmem:[%s674] sm:$0xf]
  %v676 = vld [vmem:[%s674 + $0x4] sm:$0xf]
  %v677 = vld [vmem:[%s674 + $0x8] sm:$0xf]
  %v678 = vld [vmem:[%s674 + $0xc] sm:$0xf]
  %v679 = vld [vmem:[%s674 + $0x10] sm:$0xf]
  %v680 = vld [vmem:[%s674 + $0x14] sm:$0xf]
  %v681 = vld [vmem:[%s674 + $0x18] sm:$0xf]
  %v682 = vld [vmem:[%s674 + $0x1c] sm:$0xf]
  %v683 = vld [vmem:[%s674 + $0x20] sm:$0xf]
  %v684 = vld [vmem:[%s674 + $0x24] sm:$0xf]
  %v685 = vld [vmem:[%s674 + $0x28] sm:$0xf]
  %v686 = vld [vmem:[%s674 + $0x2c] sm:$0xf]
  %v687 = vld [vmem:[%s674 + $0x30] sm:$0xf]
  %v688 = vld [vmem:[%s674 + $0x34] sm:$0xf]
  %v689 = vld [vmem:[%s674 + $0x38] sm:$0xf]
  %v690 = vld [vmem:[%s674 + $0x3c] sm:$0xf]
  %v691 = vld [vmem:[%s5 + $0xc] sm:$0x1]
  %v692 = vlaneseq
  %v693 = vshrl.u32 %v692, 7
  %v694 = vsub.s32 0, %v693
  %v695 = vrot.slane %v691, %v694
  %v712 = vunpack.c.l.b16 %v675
  %v713 = vunpack.c.l.b16 %v676
  %v714 = vunpack.c.l.b16 %v677
  %v715 = vunpack.c.l.b16 %v678
  %v716 = vunpack.c.l.b16 %v679
  %v717 = vunpack.c.l.b16 %v680
  %v718 = vunpack.c.l.b16 %v681
  %v719 = vunpack.c.l.b16 %v682
  %v720 = vunpack.c.l.b16 %v683
  %v721 = vunpack.c.l.b16 %v684
  %v722 = vunpack.c.l.b16 %v685
  %v723 = vunpack.c.l.b16 %v686
  %v724 = vunpack.c.l.b16 %v687
  %v725 = vunpack.c.l.b16 %v688
  %v726 = vunpack.c.l.b16 %v689
  %v727 = vunpack.c.l.b16 %v690
  %v728 = vpack.c.b16 %v713, %v712
  %v729 = vpack.c.b16 %v715, %v714
  %v730 = vpack.c.b16 %v717, %v716
  %v731 = vpack.c.b16 %v719, %v718
  %v732 = vpack.c.b16 %v721, %v720
  %v733 = vpack.c.b16 %v723, %v722
  %v734 = vpack.c.b16 %v725, %v724
  %v735 = vpack.c.b16 %v727, %v726
  %744 = vmatprep.subr.bf16.mxu0 0
  %745 = vmatpush1.bf16.msra.mxu0 %v728
  %746 = vmatprep.subr.bf16.mxu0 0
  %747 = vmatpush1.bf16.msra.mxu0 %v729
  %748 = vmatprep.subr.bf16.mxu0 0
  %749 = vmatpush1.bf16.msra.mxu0 %v730
  %750 = vmatprep.subr.bf16.mxu0 0
  %751 = vmatpush1.bf16.msra.mxu0 %v731
  %752 = vmatprep.subr.bf16.mxu0 0
  %753 = vmatpush1.bf16.msra.mxu0 %v732
  %754 = vmatprep.subr.bf16.mxu0 0
  %755 = vmatpush1.bf16.msra.mxu0 %v733
  %756 = vmatprep.subr.bf16.mxu0 0
  %757 = vmatpush1.bf16.msra.mxu0 %v734
  %758 = vmatprep.subr.bf16.mxu0 0
  %759 = vmatpush1.bf16.msra.mxu0 %v735
  %760 = vmatprep.subr.bf16.mxu0 0
  %761 = vmatpush1.bf16.msra.mxu0 0
  %762 = vmatprep.subr.bf16.mxu0 0
  %763 = vmatpush1.bf16.msra.mxu0 0
  %764 = vmatprep.subr.bf16.mxu0 0
  %765 = vmatpush1.bf16.msra.mxu0 0
  %766 = vmatprep.subr.bf16.mxu0 0
  %767 = vmatpush1.bf16.msra.mxu0 0
  %768 = vmatprep.subr.bf16.mxu0 0
  %769 = vmatpush1.bf16.msra.mxu0 0
  %770 = vmatprep.subr.bf16.mxu0 0
  %771 = vmatpush1.bf16.msra.mxu0 0
  %772 = vmatprep.subr.bf16.mxu0 0
  %773 = vmatpush1.bf16.msra.mxu0 0
  %774 = vmatprep.subr.bf16.mxu0 0
  %775 = vmatpush1.bf16.msra.mxu0 0
  %776 = vmatprep.mubr.bf16.mxu0 0
  %777 = vmatmul.mubr.bf16.gmra.mrb[0].mxu0 %v673
  %v778 = vpop.f32.mrb[0].mxu0
  %v779 = vadd.f32 %v695, %v778
  %v780 = vpop.f32.mrb[0].mxu0
  %v781 = vpop.f32.mrb[0].mxu0
  %v782 = vadd.f32 %v695, %v781
  %v783 = vpop.f32.mrb[0].mxu0
  %784 = vdwg.mxu0
  %v785 = vadd.f32 %v586, %v779
  %v786 = vadd.f32 %v587, %v782
  %v787 = vld [vmem:[%s5 + $0xd] sm:$0x1]
  %v788 = vld [vmem:[%s5 + $0xe] sm:$0x1]
  %v789 = vsel %vm131, %v785, 0.0
  %790 = vadd.xlane.f32.xlu0 %v789
  %v791 = vpop.xlane.xlu0 %790
  %v792 = vsel %vm131, %v786, 0.0
  %793 = vadd.xlane.f32.xlu0 %v792
  %v794 = vpop.xlane.xlu0 %793
  %v795 = vmul.f32 %v791, 0.015625
  %v796 = vmul.f32 %v794, 0.015625
  %v797 = vmul.f32 %v785, %v785
  %v798 = vmul.f32 %v786, %v786
  %v799 = vsel %vm131, %v797, 0.0
  %800 = vadd.xlane.f32.xlu0 %v799
  %v801 = vpop.xlane.xlu0 %800
  %v802 = vsel %vm131, %v798, 0.0
  %803 = vadd.xlane.f32.xlu0 %v802
  %v804 = vpop.xlane.xlu0 %803
  %v805 = vmul.f32 %v801, 0.015625
  %v806 = vmul.f32 %v804, 0.015625
  %v807 = vmul.f32 %v795, %v795
  %v808 = vmul.f32 %v796, %v796
  %v809 = vsub.f32 %v805, %v807
  %v810 = vsub.f32 %v806, %v808
  %v811 = vsub.f32 %v785, %v795
  %v812 = vsub.f32 %v786, %v796
  %v813 = vadd.f32 %v809, 1e-05
  %v814 = vadd.f32 %v810, 1e-05
  %v815 = vrsqrt.pop %v813
  %v816 = vrsqrt.pop %v814
  %v817 = vmul.f32 %v811, %v815
  %v818 = vmul.f32 %v812, %v816
  %v819 = vlaneseq
  %v820 = vshrl.u32 %v819, 7
  %v821 = vsub.s32 0, %v820
  %v822 = vrot.slane %v787, %v821
  %v823 = vmul.f32 %v817, %v822
  %v824 = vmul.f32 %v818, %v822
  %v825 = vlaneseq
  %v826 = vshrl.u32 %v825, 7
  %v827 = vsub.s32 0, %v826
  %v828 = vrot.slane %v788, %v827
  %v829 = vadd.f32 %v823, %v828
  %v830 = vadd.f32 %v824, %v828
  %v831 = vpack.c.bf16 %v830, %v829
  %s832 = scalar_lea.vmem %s2, 64
  %v833 = vld [vmem:[%s832] sm:$0xf]
  %v834 = vld [vmem:[%s832 + $0x4] sm:$0xf]
  %v835 = vld [vmem:[%s832 + $0x8] sm:$0xf]
  %v836 = vld [vmem:[%s832 + $0xc] sm:$0xf]
  %v837 = vld [vmem:[%s832 + $0x10] sm:$0xf]
  %v838 = vld [vmem:[%s832 + $0x14] sm:$0xf]
  %v839 = vld [vmem:[%s832 + $0x18] sm:$0xf]
  %v840 = vld [vmem:[%s832 + $0x1c] sm:$0xf]
  %v841 = vld [vmem:[%s5 + $0xf] sm:$0x1]
  %v842 = vlaneseq
  %v843 = vshrl.u32 %v842, 7
  %v844 = vsub.s32 0, %v843
  %v845 = vrot.slane %v841, %v844
  %v854 = vunpack.c.l.b16 %v833
  %v855 = vunpack.c.l.b16 %v834
  %v856 = vunpack.c.l.b16 %v835
  %v857 = vunpack.c.l.b16 %v836
  %v858 = vunpack.c.l.b16 %v837
  %v859 = vunpack.c.l.b16 %v838
  %v860 = vunpack.c.l.b16 %v839
  %v861 = vunpack.c.l.b16 %v840
  %v862 = vpack.c.b16 %v855, %v854
  %v863 = vpack.c.b16 %v857, %v856
  %v864 = vpack.c.b16 %v859, %v858
  %v865 = vpack.c.b16 %v861, %v860
  %v871 = vsel %vm131, %v831, 0
  %873 = vmatprep.subr.bf16.mxu0 0
  %874 = vmatpush1.bf16.msra.mxu0 %v862
  %875 = vmatprep.subr.bf16.mxu0 0
  %876 = vmatpush1.bf16.msra.mxu0 %v863
  %877 = vmatprep.subr.bf16.mxu0 0
  %878 = vmatpush1.bf16.msra.mxu0 %v864
  %879 = vmatprep.subr.bf16.mxu0 0
  %880 = vmatpush1.bf16.msra.mxu0 %v865
  %881 = vmatprep.subr.bf16.mxu0 0
  %882 = vmatpush1.bf16.msra.mxu0 0
  %883 = vmatprep.subr.bf16.mxu0 0
  %884 = vmatpush1.bf16.msra.mxu0 0
  %885 = vmatprep.subr.bf16.mxu0 0
  %886 = vmatpush1.bf16.msra.mxu0 0
  %887 = vmatprep.subr.bf16.mxu0 0
  %888 = vmatpush1.bf16.msra.mxu0 0
  %889 = vmatprep.subr.bf16.mxu0 0
  %890 = vmatpush1.bf16.msra.mxu0 0
  %891 = vmatprep.subr.bf16.mxu0 0
  %892 = vmatpush1.bf16.msra.mxu0 0
  %893 = vmatprep.subr.bf16.mxu0 0
  %894 = vmatpush1.bf16.msra.mxu0 0
  %895 = vmatprep.subr.bf16.mxu0 0
  %896 = vmatpush1.bf16.msra.mxu0 0
  %897 = vmatprep.subr.bf16.mxu0 0
  %898 = vmatpush1.bf16.msra.mxu0 0
  %899 = vmatprep.subr.bf16.mxu0 0
  %900 = vmatpush1.bf16.msra.mxu0 0
  %901 = vmatprep.subr.bf16.mxu0 0
  %902 = vmatpush1.bf16.msra.mxu0 0
  %903 = vmatprep.subr.bf16.mxu0 0
  %904 = vmatpush1.bf16.msra.mxu0 0
  %905 = vmatprep.mubr.bf16.mxu0 0
  %906 = vmatmul.mubr.bf16.gmra.mrb[0].mxu0 %v871
  %v907 = vpop.f32.mrb[0].mxu0
  %v908 = vadd.f32 %v845, %v907
  %v909 = vpop.f32.mrb[0].mxu0
  %v910 = vpop.f32.mrb[0].mxu0
  %v911 = vadd.f32 %v845, %v910
  %v912 = vpop.f32.mrb[0].mxu0
  %913 = vdwg.mxu0
  %v914 = vld [vmem:[%s5 + $0x10] sm:$0x1]
  %v915 = vld [vmem:[%s5 + $0x11] sm:$0x1]
  %v916 = vsel %vm131, %v908, 0.0
  %917 = vadd.xlane.f32.xlu0 %v916
  %v918 = vpop.xlane.xlu0 %917
  %v919 = vsel %vm131, %v911, 0.0
  %920 = vadd.xlane.f32.xlu0 %v919
  %v921 = vpop.xlane.xlu0 %920
  %v922 = vmul.f32 %v918, 0.015625
  %v923 = vmul.f32 %v921, 0.015625
  %v924 = vmul.f32 %v908, %v908
  %v925 = vmul.f32 %v911, %v911
  %v926 = vsel %vm131, %v924, 0.0
  %927 = vadd.xlane.f32.xlu0 %v926
  %v928 = vpop.xlane.xlu0 %927
  %v929 = vsel %vm131, %v925, 0.0
  %930 = vadd.xlane.f32.xlu0 %v929
  %v931 = vpop.xlane.xlu0 %930
  %v932 = vmul.f32 %v928, 0.015625
  %v933 = vmul.f32 %v931, 0.015625
  %v934 = vmul.f32 %v922, %v922
  %v935 = vmul.f32 %v923, %v923
  %v936 = vsub.f32 %v932, %v934
  %v937 = vsub.f32 %v933, %v935
  %v938 = vsub.f32 %v908, %v922
  %v939 = vsub.f32 %v911, %v923
  %v940 = vadd.f32 %v936, 1e-05
  %v941 = vadd.f32 %v937, 1e-05
  %v942 = vrsqrt.pop %v940
  %v943 = vrsqrt.pop %v941
  %v944 = vmul.f32 %v938, %v942
  %v945 = vmul.f32 %v939, %v943
  %v946 = vlaneseq
  %v947 = vshrl.u32 %v946, 7
  %v948 = vsub.s32 0, %v947
  %v949 = vrot.slane %v914, %v948
  %v950 = vmul.f32 %v944, %v949
  %v951 = vmul.f32 %v945, %v949
  %v952 = vlaneseq
  %v953 = vshrl.u32 %v952, 7
  %v954 = vsub.s32 0, %v953
  %v955 = vrot.slane %v915, %v954
  %v956 = vadd.f32 %v950, %v955
  %v957 = vadd.f32 %v951, %v955
  %v958 = vpack.c.bf16 %v957, %v956
  %s959 = scalar_lea.vmem %s3, 64
  %v960 = vld [vmem:[%s959] sm:$0xf]
  %v961 = vld [vmem:[%s959 + $0x4] sm:$0xf]
  %v962 = vld [vmem:[%s959 + $0x8] sm:$0xf]
  %v963 = vld [vmem:[%s959 + $0xc] sm:$0xf]
  %v964 = vld [vmem:[%s959 + $0x10] sm:$0xf]
  %v965 = vld [vmem:[%s959 + $0x14] sm:$0xf]
  %v966 = vld [vmem:[%s959 + $0x18] sm:$0xf]
  %v967 = vld [vmem:[%s959 + $0x1c] sm:$0xf]
  %v968 = vld [vmem:[%s5 + $0x12] sm:$0x1]
  %v969 = vlaneseq
  %v970 = vshrl.u32 %v969, 7
  %v971 = vsub.s32 0, %v970
  %v972 = vrot.slane %v968, %v971
  %v981 = vunpack.c.l.b16 %v960
  %v982 = vunpack.c.l.b16 %v961
  %v983 = vunpack.c.l.b16 %v962
  %v984 = vunpack.c.l.b16 %v963
  %v985 = vunpack.c.l.b16 %v964
  %v986 = vunpack.c.l.b16 %v965
  %v987 = vunpack.c.l.b16 %v966
  %v988 = vunpack.c.l.b16 %v967
  %v989 = vpack.c.b16 %v982, %v981
  %v990 = vpack.c.b16 %v984, %v983
  %v991 = vpack.c.b16 %v986, %v985
  %v992 = vpack.c.b16 %v988, %v987
  %v998 = vsel %vm131, %v958, 0
  %1000 = vmatprep.subr.bf16.mxu0 0
  %1001 = vmatpush1.bf16.msra.mxu0 %v989
  %1002 = vmatprep.subr.bf16.mxu0 0
  %1003 = vmatpush1.bf16.msra.mxu0 %v990
  %1004 = vmatprep.subr.bf16.mxu0 0
  %1005 = vmatpush1.bf16.msra.mxu0 %v991
  %1006 = vmatprep.subr.bf16.mxu0 0
  %1007 = vmatpush1.bf16.msra.mxu0 %v992
  %1008 = vmatprep.subr.bf16.mxu0 0
  %1009 = vmatpush1.bf16.msra.mxu0 0
  %1010 = vmatprep.subr.bf16.mxu0 0
  %1011 = vmatpush1.bf16.msra.mxu0 0
  %1012 = vmatprep.subr.bf16.mxu0 0
  %1013 = vmatpush1.bf16.msra.mxu0 0
  %1014 = vmatprep.subr.bf16.mxu0 0
  %1015 = vmatpush1.bf16.msra.mxu0 0
  %1016 = vmatprep.subr.bf16.mxu0 0
  %1017 = vmatpush1.bf16.msra.mxu0 0
  %1018 = vmatprep.subr.bf16.mxu0 0
  %1019 = vmatpush1.bf16.msra.mxu0 0
  %1020 = vmatprep.subr.bf16.mxu0 0
  %1021 = vmatpush1.bf16.msra.mxu0 0
  %1022 = vmatprep.subr.bf16.mxu0 0
  %1023 = vmatpush1.bf16.msra.mxu0 0
  %1024 = vmatprep.subr.bf16.mxu0 0
  %1025 = vmatpush1.bf16.msra.mxu0 0
  %1026 = vmatprep.subr.bf16.mxu0 0
  %1027 = vmatpush1.bf16.msra.mxu0 0
  %1028 = vmatprep.subr.bf16.mxu0 0
  %1029 = vmatpush1.bf16.msra.mxu0 0
  %1030 = vmatprep.subr.bf16.mxu0 0
  %1031 = vmatpush1.bf16.msra.mxu0 0
  %1032 = vmatprep.mubr.bf16.mxu0 0
  %1033 = vmatmul.mubr.bf16.gmra.mrb[0].mxu0 %v998
  %v1034 = vpop.f32.mrb[0].mxu0
  %v1035 = vadd.f32 %v972, %v1034
  %v1036 = vpop.f32.mrb[0].mxu0
  %v1037 = vpop.f32.mrb[0].mxu0
  %v1038 = vadd.f32 %v972, %v1037
  %v1039 = vpop.f32.mrb[0].mxu0
  %1040 = vdwg.mxu0
  %v1041 = vmax.f32 %v1035, 0.0
  %v1042 = vmax.f32 %v1038, 0.0
  %v1043 = vpack.c.bf16 %v1042, %v1041
  %s1044 = scalar_lea.vmem %s4, 128
  %v1045 = vld [vmem:[%s1044] sm:$0xf]
  %v1046 = vld [vmem:[%s1044 + $0x4] sm:$0xf]
  %v1047 = vld [vmem:[%s1044 + $0x8] sm:$0xf]
  %v1048 = vld [vmem:[%s1044 + $0xc] sm:$0xf]
  %v1049 = vld [vmem:[%s1044 + $0x10] sm:$0xf]
  %v1050 = vld [vmem:[%s1044 + $0x14] sm:$0xf]
  %v1051 = vld [vmem:[%s1044 + $0x18] sm:$0xf]
  %v1052 = vld [vmem:[%s1044 + $0x1c] sm:$0xf]
  %v1053 = vld [vmem:[%s1044 + $0x20] sm:$0xf]
  %v1054 = vld [vmem:[%s1044 + $0x24] sm:$0xf]
  %v1055 = vld [vmem:[%s1044 + $0x28] sm:$0xf]
  %v1056 = vld [vmem:[%s1044 + $0x2c] sm:$0xf]
  %v1057 = vld [vmem:[%s1044 + $0x30] sm:$0xf]
  %v1058 = vld [vmem:[%s1044 + $0x34] sm:$0xf]
  %v1059 = vld [vmem:[%s1044 + $0x38] sm:$0xf]
  %v1060 = vld [vmem:[%s1044 + $0x3c] sm:$0xf]
  %v1061 = vld [vmem:[%s5 + $0x13] sm:$0x1]
  %v1062 = vlaneseq
  %v1063 = vshrl.u32 %v1062, 7
  %v1064 = vsub.s32 0, %v1063
  %v1065 = vrot.slane %v1061, %v1064
  %v1082 = vunpack.c.l.b16 %v1045
  %v1083 = vunpack.c.l.b16 %v1046
  %v1084 = vunpack.c.l.b16 %v1047
  %v1085 = vunpack.c.l.b16 %v1048
  %v1086 = vunpack.c.l.b16 %v1049
  %v1087 = vunpack.c.l.b16 %v1050
  %v1088 = vunpack.c.l.b16 %v1051
  %v1089 = vunpack.c.l.b16 %v1052
  %v1090 = vunpack.c.l.b16 %v1053
  %v1091 = vunpack.c.l.b16 %v1054
  %v1092 = vunpack.c.l.b16 %v1055
  %v1093 = vunpack.c.l.b16 %v1056
  %v1094 = vunpack.c.l.b16 %v1057
  %v1095 = vunpack.c.l.b16 %v1058
  %v1096 = vunpack.c.l.b16 %v1059
  %v1097 = vunpack.c.l.b16 %v1060
  %v1098 = vpack.c.b16 %v1083, %v1082
  %v1099 = vpack.c.b16 %v1085, %v1084
  %v1100 = vpack.c.b16 %v1087, %v1086
  %v1101 = vpack.c.b16 %v1089, %v1088
  %v1102 = vpack.c.b16 %v1091, %v1090
  %v1103 = vpack.c.b16 %v1093, %v1092
  %v1104 = vpack.c.b16 %v1095, %v1094
  %v1105 = vpack.c.b16 %v1097, %v1096
  %1114 = vmatprep.subr.bf16.mxu0 0
  %1115 = vmatpush1.bf16.msra.mxu0 %v1098
  %1116 = vmatprep.subr.bf16.mxu0 0
  %1117 = vmatpush1.bf16.msra.mxu0 %v1099
  %1118 = vmatprep.subr.bf16.mxu0 0
  %1119 = vmatpush1.bf16.msra.mxu0 %v1100
  %1120 = vmatprep.subr.bf16.mxu0 0
  %1121 = vmatpush1.bf16.msra.mxu0 %v1101
  %1122 = vmatprep.subr.bf16.mxu0 0
  %1123 = vmatpush1.bf16.msra.mxu0 %v1102
  %1124 = vmatprep.subr.bf16.mxu0 0
  %1125 = vmatpush1.bf16.msra.mxu0 %v1103
  %1126 = vmatprep.subr.bf16.mxu0 0
  %1127 = vmatpush1.bf16.msra.mxu0 %v1104
  %1128 = vmatprep.subr.bf16.mxu0 0
  %1129 = vmatpush1.bf16.msra.mxu0 %v1105
  %1130 = vmatprep.subr.bf16.mxu0 0
  %1131 = vmatpush1.bf16.msra.mxu0 0
  %1132 = vmatprep.subr.bf16.mxu0 0
  %1133 = vmatpush1.bf16.msra.mxu0 0
  %1134 = vmatprep.subr.bf16.mxu0 0
  %1135 = vmatpush1.bf16.msra.mxu0 0
  %1136 = vmatprep.subr.bf16.mxu0 0
  %1137 = vmatpush1.bf16.msra.mxu0 0
  %1138 = vmatprep.subr.bf16.mxu0 0
  %1139 = vmatpush1.bf16.msra.mxu0 0
  %1140 = vmatprep.subr.bf16.mxu0 0
  %1141 = vmatpush1.bf16.msra.mxu0 0
  %1142 = vmatprep.subr.bf16.mxu0 0
  %1143 = vmatpush1.bf16.msra.mxu0 0
  %1144 = vmatprep.subr.bf16.mxu0 0
  %1145 = vmatpush1.bf16.msra.mxu0 0
  %1146 = vmatprep.mubr.bf16.mxu0 0
  %1147 = vmatmul.mubr.bf16.gmra.mrb[0].mxu0 %v1043
  %v1148 = vpop.f32.mrb[0].mxu0
  %v1149 = vadd.f32 %v1065, %v1148
  %v1150 = vpop.f32.mrb[0].mxu0
  %v1151 = vpop.f32.mrb[0].mxu0
  %v1152 = vadd.f32 %v1065, %v1151
  %v1153 = vpop.f32.mrb[0].mxu0
  %1154 = vdwg.mxu0
  %v1155 = vadd.f32 %v956, %v1149
  %v1156 = vadd.f32 %v957, %v1152
  %v1157 = vld [vmem:[%s5 + $0x14] sm:$0x1]
  %v1158 = vld [vmem:[%s5 + $0x15] sm:$0x1]
  %v1159 = vsel %vm131, %v1155, 0.0
  %1160 = vadd.xlane.f32.xlu0 %v1159
  %v1161 = vpop.xlane.xlu0 %1160
  %v1162 = vsel %vm131, %v1156, 0.0
  %1163 = vadd.xlane.f32.xlu0 %v1162
  %v1164 = vpop.xlane.xlu0 %1163
  %v1165 = vmul.f32 %v1161, 0.015625
  %v1166 = vmul.f32 %v1164, 0.015625
  %v1167 = vmul.f32 %v1155, %v1155
  %v1168 = vmul.f32 %v1156, %v1156
  %v1169 = vsel %vm131, %v1167, 0.0
  %1170 = vadd.xlane.f32.xlu0 %v1169
  %v1171 = vpop.xlane.xlu0 %1170
  %v1172 = vsel %vm131, %v1168, 0.0
  %1173 = vadd.xlane.f32.xlu0 %v1172
  %v1174 = vpop.xlane.xlu0 %1173
  %v1175 = vmul.f32 %v1171, 0.015625
  %v1176 = vmul.f32 %v1174, 0.015625
  %v1177 = vmul.f32 %v1165, %v1165
  %v1178 = vmul.f32 %v1166, %v1166
  %v1179 = vsub.f32 %v1175, %v1177
  %v1180 = vsub.f32 %v1176, %v1178
  %v1181 = vsub.f32 %v1155, %v1165
  %v1182 = vsub.f32 %v1156, %v1166
  %v1183 = vadd.f32 %v1179, 1e-05
  %v1184 = vadd.f32 %v1180, 1e-05
  %v1185 = vrsqrt.pop %v1183
  %v1186 = vrsqrt.pop %v1184
  %v1187 = vmul.f32 %v1181, %v1185
  %v1188 = vmul.f32 %v1182, %v1186
  %v1189 = vlaneseq
  %v1190 = vshrl.u32 %v1189, 7
  %v1191 = vsub.s32 0, %v1190
  %v1192 = vrot.slane %v1157, %v1191
  %v1193 = vmul.f32 %v1187, %v1192
  %v1194 = vmul.f32 %v1188, %v1192
  %v1195 = vlaneseq
  %v1196 = vshrl.u32 %v1195, 7
  %v1197 = vsub.s32 0, %v1196
  %v1198 = vrot.slane %v1158, %v1197
  %v1199 = vadd.f32 %v1193, %v1198
  %v1200 = vadd.f32 %v1194, %v1198
  %v1201 = vpack.c.bf16 %v1200, %v1199
  %s1202 = scalar_lea.vmem %s2, 96
  %v1203 = vld [vmem:[%s1202] sm:$0xf]
  %v1204 = vld [vmem:[%s1202 + $0x4] sm:$0xf]
  %v1205 = vld [vmem:[%s1202 + $0x8] sm:$0xf]
  %v1206 = vld [vmem:[%s1202 + $0xc] sm:$0xf]
  %v1207 = vld [vmem:[%s1202 + $0x10] sm:$0xf]
  %v1208 = vld [vmem:[%s1202 + $0x14] sm:$0xf]
  %v1209 = vld [vmem:[%s1202 + $0x18] sm:$0xf]
  %v1210 = vld [vmem:[%s1202 + $0x1c] sm:$0xf]
  %v1211 = vld [vmem:[%s5 + $0x16] sm:$0x1]
  %v1212 = vlaneseq
  %v1213 = vshrl.u32 %v1212, 7
  %v1214 = vsub.s32 0, %v1213
  %v1215 = vrot.slane %v1211, %v1214
  %v1224 = vunpack.c.l.b16 %v1203
  %v1225 = vunpack.c.l.b16 %v1204
  %v1226 = vunpack.c.l.b16 %v1205
  %v1227 = vunpack.c.l.b16 %v1206
  %v1228 = vunpack.c.l.b16 %v1207
  %v1229 = vunpack.c.l.b16 %v1208
  %v1230 = vunpack.c.l.b16 %v1209
  %v1231 = vunpack.c.l.b16 %v1210
  %v1232 = vpack.c.b16 %v1225, %v1224
  %v1233 = vpack.c.b16 %v1227, %v1226
  %v1234 = vpack.c.b16 %v1229, %v1228
  %v1235 = vpack.c.b16 %v1231, %v1230
  %v1241 = vsel %vm131, %v1201, 0
  %1243 = vmatprep.subr.bf16.mxu0 0
  %1244 = vmatpush1.bf16.msra.mxu0 %v1232
  %1245 = vmatprep.subr.bf16.mxu0 0
  %1246 = vmatpush1.bf16.msra.mxu0 %v1233
  %1247 = vmatprep.subr.bf16.mxu0 0
  %1248 = vmatpush1.bf16.msra.mxu0 %v1234
  %1249 = vmatprep.subr.bf16.mxu0 0
  %1250 = vmatpush1.bf16.msra.mxu0 %v1235
  %1251 = vmatprep.subr.bf16.mxu0 0
  %1252 = vmatpush1.bf16.msra.mxu0 0
  %1253 = vmatprep.subr.bf16.mxu0 0
  %1254 = vmatpush1.bf16.msra.mxu0 0
  %1255 = vmatprep.subr.bf16.mxu0 0
  %1256 = vmatpush1.bf16.msra.mxu0 0
  %1257 = vmatprep.subr.bf16.mxu0 0
  %1258 = vmatpush1.bf16.msra.mxu0 0
  %1259 = vmatprep.subr.bf16.mxu0 0
  %1260 = vmatpush1.bf16.msra.mxu0 0
  %1261 = vmatprep.subr.bf16.mxu0 0
  %1262 = vmatpush1.bf16.msra.mxu0 0
  %1263 = vmatprep.subr.bf16.mxu0 0
  %1264 = vmatpush1.bf16.msra.mxu0 0
  %1265 = vmatprep.subr.bf16.mxu0 0
  %1266 = vmatpush1.bf16.msra.mxu0 0
  %1267 = vmatprep.subr.bf16.mxu0 0
  %1268 = vmatpush1.bf16.msra.mxu0 0
  %1269 = vmatprep.subr.bf16.mxu0 0
  %1270 = vmatpush1.bf16.msra.mxu0 0
  %1271 = vmatprep.subr.bf16.mxu0 0
  %1272 = vmatpush1.bf16.msra.mxu0 0
  %1273 = vmatprep.subr.bf16.mxu0 0
  %1274 = vmatpush1.bf16.msra.mxu0 0
  %1275 = vmatprep.mubr.bf16.mxu0 0
  %1276 = vmatmul.mubr.bf16.gmra.mrb[0].mxu0 %v1241
  %v1277 = vpop.f32.mrb[0].mxu0
  %v1278 = vadd.f32 %v1215, %v1277
  %v1279 = vpop.f32.mrb[0].mxu0
  %v1280 = vpop.f32.mrb[0].mxu0
  %v1281 = vadd.f32 %v1215, %v1280
  %v1282 = vpop.f32.mrb[0].mxu0
  %1283 = vdwg.mxu0
  %v1284 = vld [vmem:[%s5 + $0x17] sm:$0x1]
  %v1285 = vld [vmem:[%s5 + $0x18] sm:$0x1]
  %v1286 = vsel %vm131, %v1278, 0.0
  %1287 = vadd.xlane.f32.xlu0 %v1286
  %v1288 = vpop.xlane.xlu0 %1287
  %v1289 = vsel %vm131, %v1281, 0.0
  %1290 = vadd.xlane.f32.xlu0 %v1289
  %v1291 = vpop.xlane.xlu0 %1290
  %v1292 = vmul.f32 %v1288, 0.015625
  %v1293 = vmul.f32 %v1291, 0.015625
  %v1294 = vmul.f32 %v1278, %v1278
  %v1295 = vmul.f32 %v1281, %v1281
  %v1296 = vsel %vm131, %v1294, 0.0
  %1297 = vadd.xlane.f32.xlu0 %v1296
  %v1298 = vpop.xlane.xlu0 %1297
  %v1299 = vsel %vm131, %v1295, 0.0
  %1300 = vadd.xlane.f32.xlu0 %v1299
  %v1301 = vpop.xlane.xlu0 %1300
  %v1302 = vmul.f32 %v1298, 0.015625
  %v1303 = vmul.f32 %v1301, 0.015625
  %v1304 = vmul.f32 %v1292, %v1292
  %v1305 = vmul.f32 %v1293, %v1293
  %v1306 = vsub.f32 %v1302, %v1304
  %v1307 = vsub.f32 %v1303, %v1305
  %v1308 = vsub.f32 %v1278, %v1292
  %v1309 = vsub.f32 %v1281, %v1293
  %v1310 = vadd.f32 %v1306, 1e-05
  %v1311 = vadd.f32 %v1307, 1e-05
  %v1312 = vrsqrt.pop %v1310
  %v1313 = vrsqrt.pop %v1311
  %v1314 = vmul.f32 %v1308, %v1312
  %v1315 = vmul.f32 %v1309, %v1313
  %v1316 = vlaneseq
  %v1317 = vshrl.u32 %v1316, 7
  %v1318 = vsub.s32 0, %v1317
  %v1319 = vrot.slane %v1284, %v1318
  %v1320 = vmul.f32 %v1314, %v1319
  %v1321 = vmul.f32 %v1315, %v1319
  %v1322 = vlaneseq
  %v1323 = vshrl.u32 %v1322, 7
  %v1324 = vsub.s32 0, %v1323
  %v1325 = vrot.slane %v1285, %v1324
  %v1326 = vadd.f32 %v1320, %v1325
  %v1327 = vadd.f32 %v1321, %v1325
  %v1328 = vpack.c.bf16 %v1327, %v1326
  %s1329 = scalar_lea.vmem %s3, 96
  %v1330 = vld [vmem:[%s1329] sm:$0xf]
  %v1331 = vld [vmem:[%s1329 + $0x4] sm:$0xf]
  %v1332 = vld [vmem:[%s1329 + $0x8] sm:$0xf]
  %v1333 = vld [vmem:[%s1329 + $0xc] sm:$0xf]
  %v1334 = vld [vmem:[%s1329 + $0x10] sm:$0xf]
  %v1335 = vld [vmem:[%s1329 + $0x14] sm:$0xf]
  %v1336 = vld [vmem:[%s1329 + $0x18] sm:$0xf]
  %v1337 = vld [vmem:[%s1329 + $0x1c] sm:$0xf]
  %v1338 = vld [vmem:[%s5 + $0x19] sm:$0x1]
  %v1339 = vlaneseq
  %v1340 = vshrl.u32 %v1339, 7
  %v1341 = vsub.s32 0, %v1340
  %v1342 = vrot.slane %v1338, %v1341
  %v1351 = vunpack.c.l.b16 %v1330
  %v1352 = vunpack.c.l.b16 %v1331
  %v1353 = vunpack.c.l.b16 %v1332
  %v1354 = vunpack.c.l.b16 %v1333
  %v1355 = vunpack.c.l.b16 %v1334
  %v1356 = vunpack.c.l.b16 %v1335
  %v1357 = vunpack.c.l.b16 %v1336
  %v1358 = vunpack.c.l.b16 %v1337
  %v1359 = vpack.c.b16 %v1352, %v1351
  %v1360 = vpack.c.b16 %v1354, %v1353
  %v1361 = vpack.c.b16 %v1356, %v1355
  %v1362 = vpack.c.b16 %v1358, %v1357
  %v1368 = vsel %vm131, %v1328, 0
  %1370 = vmatprep.subr.bf16.mxu0 0
  %1371 = vmatpush1.bf16.msra.mxu0 %v1359
  %1372 = vmatprep.subr.bf16.mxu0 0
  %1373 = vmatpush1.bf16.msra.mxu0 %v1360
  %1374 = vmatprep.subr.bf16.mxu0 0
  %1375 = vmatpush1.bf16.msra.mxu0 %v1361
  %1376 = vmatprep.subr.bf16.mxu0 0
  %1377 = vmatpush1.bf16.msra.mxu0 %v1362
  %1378 = vmatprep.subr.bf16.mxu0 0
  %1379 = vmatpush1.bf16.msra.mxu0 0
  %1380 = vmatprep.subr.bf16.mxu0 0
  %1381 = vmatpush1.bf16.msra.mxu0 0
  %1382 = vmatprep.subr.bf16.mxu0 0
  %1383 = vmatpush1.bf16.msra.mxu0 0
  %1384 = vmatprep.subr.bf16.mxu0 0
  %1385 = vmatpush1.bf16.msra.mxu0 0
  %1386 = vmatprep.subr.bf16.mxu0 0
  %1387 = vmatpush1.bf16.msra.mxu0 0
  %1388 = vmatprep.subr.bf16.mxu0 0
  %1389 = vmatpush1.bf16.msra.mxu0 0
  %1390 = vmatprep.subr.bf16.mxu0 0
  %1391 = vmatpush1.bf16.msra.mxu0 0
  %1392 = vmatprep.subr.bf16.mxu0 0
  %1393 = vmatpush1.bf16.msra.mxu0 0
  %1394 = vmatprep.subr.bf16.mxu0 0
  %1395 = vmatpush1.bf16.msra.mxu0 0
  %1396 = vmatprep.subr.bf16.mxu0 0
  %1397 = vmatpush1.bf16.msra.mxu0 0
  %1398 = vmatprep.subr.bf16.mxu0 0
  %1399 = vmatpush1.bf16.msra.mxu0 0
  %1400 = vmatprep.subr.bf16.mxu0 0
  %1401 = vmatpush1.bf16.msra.mxu0 0
  %1402 = vmatprep.mubr.bf16.mxu0 0
  %1403 = vmatmul.mubr.bf16.gmra.mrb[0].mxu0 %v1368
  %v1404 = vpop.f32.mrb[0].mxu0
  %v1405 = vadd.f32 %v1342, %v1404
  %v1406 = vpop.f32.mrb[0].mxu0
  %v1407 = vpop.f32.mrb[0].mxu0
  %v1408 = vadd.f32 %v1342, %v1407
  %v1409 = vpop.f32.mrb[0].mxu0
  %1410 = vdwg.mxu0
  %v1411 = vmax.f32 %v1405, 0.0
  %v1412 = vmax.f32 %v1408, 0.0
  %v1413 = vpack.c.bf16 %v1412, %v1411
  %s1414 = scalar_lea.vmem %s4, 192
  %v1415 = vld [vmem:[%s1414] sm:$0xf]
  %v1416 = vld [vmem:[%s1414 + $0x4] sm:$0xf]
  %v1417 = vld [vmem:[%s1414 + $0x8] sm:$0xf]
  %v1418 = vld [vmem:[%s1414 + $0xc] sm:$0xf]
  %v1419 = vld [vmem:[%s1414 + $0x10] sm:$0xf]
  %v1420 = vld [vmem:[%s1414 + $0x14] sm:$0xf]
  %v1421 = vld [vmem:[%s1414 + $0x18] sm:$0xf]
  %v1422 = vld [vmem:[%s1414 + $0x1c] sm:$0xf]
  %v1423 = vld [vmem:[%s1414 + $0x20] sm:$0xf]
  %v1424 = vld [vmem:[%s1414 + $0x24] sm:$0xf]
  %v1425 = vld [vmem:[%s1414 + $0x28] sm:$0xf]
  %v1426 = vld [vmem:[%s1414 + $0x2c] sm:$0xf]
  %v1427 = vld [vmem:[%s1414 + $0x30] sm:$0xf]
  %v1428 = vld [vmem:[%s1414 + $0x34] sm:$0xf]
  %v1429 = vld [vmem:[%s1414 + $0x38] sm:$0xf]
  %v1430 = vld [vmem:[%s1414 + $0x3c] sm:$0xf]
  %v1431 = vld [vmem:[%s5 + $0x1a] sm:$0x1]
  %v1432 = vlaneseq
  %v1433 = vshrl.u32 %v1432, 7
  %v1434 = vsub.s32 0, %v1433
  %v1435 = vrot.slane %v1431, %v1434
  %v1452 = vunpack.c.l.b16 %v1415
  %v1453 = vunpack.c.l.b16 %v1416
  %v1454 = vunpack.c.l.b16 %v1417
  %v1455 = vunpack.c.l.b16 %v1418
  %v1456 = vunpack.c.l.b16 %v1419
  %v1457 = vunpack.c.l.b16 %v1420
  %v1458 = vunpack.c.l.b16 %v1421
  %v1459 = vunpack.c.l.b16 %v1422
  %v1460 = vunpack.c.l.b16 %v1423
  %v1461 = vunpack.c.l.b16 %v1424
  %v1462 = vunpack.c.l.b16 %v1425
  %v1463 = vunpack.c.l.b16 %v1426
  %v1464 = vunpack.c.l.b16 %v1427
  %v1465 = vunpack.c.l.b16 %v1428
  %v1466 = vunpack.c.l.b16 %v1429
  %v1467 = vunpack.c.l.b16 %v1430
  %v1468 = vpack.c.b16 %v1453, %v1452
  %v1469 = vpack.c.b16 %v1455, %v1454
  %v1470 = vpack.c.b16 %v1457, %v1456
  %v1471 = vpack.c.b16 %v1459, %v1458
  %v1472 = vpack.c.b16 %v1461, %v1460
  %v1473 = vpack.c.b16 %v1463, %v1462
  %v1474 = vpack.c.b16 %v1465, %v1464
  %v1475 = vpack.c.b16 %v1467, %v1466
  %1484 = vmatprep.subr.bf16.mxu0 0
  %1485 = vmatpush1.bf16.msra.mxu0 %v1468
  %1486 = vmatprep.subr.bf16.mxu0 0
  %1487 = vmatpush1.bf16.msra.mxu0 %v1469
  %1488 = vmatprep.subr.bf16.mxu0 0
  %1489 = vmatpush1.bf16.msra.mxu0 %v1470
  %1490 = vmatprep.subr.bf16.mxu0 0
  %1491 = vmatpush1.bf16.msra.mxu0 %v1471
  %1492 = vmatprep.subr.bf16.mxu0 0
  %1493 = vmatpush1.bf16.msra.mxu0 %v1472
  %1494 = vmatprep.subr.bf16.mxu0 0
  %1495 = vmatpush1.bf16.msra.mxu0 %v1473
  %1496 = vmatprep.subr.bf16.mxu0 0
  %1497 = vmatpush1.bf16.msra.mxu0 %v1474
  %1498 = vmatprep.subr.bf16.mxu0 0
  %1499 = vmatpush1.bf16.msra.mxu0 %v1475
  %1500 = vmatprep.subr.bf16.mxu0 0
  %1501 = vmatpush1.bf16.msra.mxu0 0
  %1502 = vmatprep.subr.bf16.mxu0 0
  %1503 = vmatpush1.bf16.msra.mxu0 0
  %1504 = vmatprep.subr.bf16.mxu0 0
  %1505 = vmatpush1.bf16.msra.mxu0 0
  %1506 = vmatprep.subr.bf16.mxu0 0
  %1507 = vmatpush1.bf16.msra.mxu0 0
  %1508 = vmatprep.subr.bf16.mxu0 0
  %1509 = vmatpush1.bf16.msra.mxu0 0
  %1510 = vmatprep.subr.bf16.mxu0 0
  %1511 = vmatpush1.bf16.msra.mxu0 0
  %1512 = vmatprep.subr.bf16.mxu0 0
  %1513 = vmatpush1.bf16.msra.mxu0 0
  %1514 = vmatprep.subr.bf16.mxu0 0
  %1515 = vmatpush1.bf16.msra.mxu0 0
  %1516 = vmatprep.mubr.bf16.mxu0 0
  %1517 = vmatmul.mubr.bf16.gmra.mrb[0].mxu0 %v1413
  %v1518 = vpop.f32.mrb[0].mxu0
  %v1519 = vadd.f32 %v1435, %v1518
  %v1520 = vpop.f32.mrb[0].mxu0
  %v1521 = vpop.f32.mrb[0].mxu0
  %v1522 = vadd.f32 %v1435, %v1521
  %v1523 = vpop.f32.mrb[0].mxu0
  %1524 = vdwg.mxu0
  %v1525 = vadd.f32 %v1326, %v1519
  %v1526 = vadd.f32 %v1327, %v1522
  %v1527 = vld [vmem:[%s5 + $0x1b] sm:$0x1]
  %v1528 = vld [vmem:[%s5 + $0x1c] sm:$0x1]
  %v1529 = vsel %vm131, %v1525, 0.0
  %1530 = vadd.xlane.f32.xlu0 %v1529
  %v1531 = vpop.xlane.xlu0 %1530
  %v1532 = vsel %vm131, %v1526, 0.0
  %1533 = vadd.xlane.f32.xlu0 %v1532
  %v1534 = vpop.xlane.xlu0 %1533
  %v1535 = vmul.f32 %v1531, 0.015625
  %v1536 = vmul.f32 %v1534, 0.015625
  %v1537 = vmul.f32 %v1525, %v1525
  %v1538 = vmul.f32 %v1526, %v1526
  %v1539 = vsel %vm131, %v1537, 0.0
  %1540 = vadd.xlane.f32.xlu0 %v1539
  %v1541 = vpop.xlane.xlu0 %1540
  %v1542 = vsel %vm131, %v1538, 0.0
  %1543 = vadd.xlane.f32.xlu0 %v1542
  %v1544 = vpop.xlane.xlu0 %1543
  %v1545 = vmul.f32 %v1541, 0.015625
  %v1546 = vmul.f32 %v1544, 0.015625
  %v1547 = vmul.f32 %v1535, %v1535
  %v1548 = vmul.f32 %v1536, %v1536
  %v1549 = vsub.f32 %v1545, %v1547
  %v1550 = vsub.f32 %v1546, %v1548
  %v1551 = vsub.f32 %v1525, %v1535
  %v1552 = vsub.f32 %v1526, %v1536
  %v1553 = vadd.f32 %v1549, 1e-05
  %v1554 = vadd.f32 %v1550, 1e-05
  %v1555 = vrsqrt.pop %v1553
  %v1556 = vrsqrt.pop %v1554
  %v1557 = vmul.f32 %v1551, %v1555
  %v1558 = vmul.f32 %v1552, %v1556
  %v1559 = vlaneseq
  %v1560 = vshrl.u32 %v1559, 7
  %v1561 = vsub.s32 0, %v1560
  %v1562 = vrot.slane %v1527, %v1561
  %v1563 = vmul.f32 %v1557, %v1562
  %v1564 = vmul.f32 %v1558, %v1562
  %v1565 = vlaneseq
  %v1566 = vshrl.u32 %v1565, 7
  %v1567 = vsub.s32 0, %v1566
  %v1568 = vrot.slane %v1528, %v1567
  %v1569 = vadd.f32 %v1563, %v1568
  %v1570 = vadd.f32 %v1564, %v1568
  %v1571 = vld [vmem:[%s5 + $0x1d] sm:$0x1]
  %v1572 = vlaneseq
  %v1573 = vshrl.u32 %v1572, 7
  %v1574 = vsub.s32 0, %v1573
  %v1575 = vrot.slane %v1571, %v1574
  %v1576 = vmul.f32 %v1569, %v1575
  %v1577 = vmul.f32 %v1570, %v1575
  %v1578 = vsel %vm131, %v1576, 0.0
  %1579 = vadd.xlane.f32.xlu0 %v1578
  %v1580 = vpop.xlane.xlu0 %1579
  %v1581 = vsel %vm131, %v1577, 0.0
  %1582 = vadd.xlane.f32.xlu0 %v1581
  %v1583 = vpop.xlane.xlu0 %1582
  %v1584 = vadd.f32 %v1580, %v1575
  %v1585 = vadd.f32 %v1583, %v1575
  %v1586 = vxor.u32 %v1584, 2147483648
  %v1587 = vxor.u32 %v1585, 2147483648
  %v1588 = vmul.f32 %v1586, 1.442695
  %v1589 = vpow.pop %v1588
  %v1590 = vmul.f32 %v1587, 1.442695
  %v1591 = vpow.pop %v1590
  %v1592 = vadd.f32 %v1589, 1.0
  %v1593 = vadd.f32 %v1591, 1.0
  %v1594 = vrcp.pop %v1592
  %v1595 = vmul.f32 1.0, %v1594
  %v1596 = vrcp.pop %v1593
  %v1597 = vmul.f32 1.0, %v1596
  %1600 = vrot.lane.b32.xlu0 %v1595, 64
  %v1601 = vpop.permute.xlu0 %1600
  %1602 = vrot.lane.b32.xlu0 %v1597, 64
  %v1603 = vpop.permute.xlu0 %1602
  %vm1606 = vcmask 7168
  %1607 = vst.msk [vmem:[%s6] sm:$0xff] %vm1606, %v1601
  %1608 = vst.msk [vmem:[%s6 + $0x8] sm:$0xff] %vm1606, %v1603
  // Predicated region
  $region26: #{transformer_forward.1} parent=0 // pred_check
    _
  $region27: #{transformer_forward.1} parent=0 // pred_check_branch
    %1610 = sbr.rel (0) target = $region29
  $region28: #{transformer_forward.1} parent=0 // pred_region
    _
  $region29: #{transformer_forward.1} parent=0 // pred_fallthru
    _
  // Predicated region
  $region30: #{transformer_forward.1} parent=0 // pred_check
    _
  $region31: #{transformer_forward.1} parent=0 // pred_check_branch
    %1612 = sbr.rel (0) target = $region33
  $region32: #{transformer_forward.1} parent=0 // pred_region
    _
  $region33: #{transformer_forward.1} parent=0 // pred_fallthru
    _

</llo_original>
